<compile_context>
chip_gen: v5e
topology: v5e:2x2
jax: 0.10.0
libtpu: 0.0.40
codegen_flags: <defaults>
</compile_context>

<pallas_src>
import math

import jax
import jax.numpy as jnp
from jax.experimental import pallas as pl
from jax.experimental.pallas import tpu as pltpu


# ---------------------------------------------------------------------------
# Device heuristics
# ---------------------------------------------------------------------------

def _tpu_kind() -> str:
    try:
        return jax.devices()[0].device_kind.lower()
    except Exception:
        return ""


def _num_tensorcores(kind: str) -> int:
    # v7x packs 2 TensorCores per chip; v5e/v6e have 1.
    return 2 if "7" in kind else 1


def _per_step_vmem_budget(kind: str) -> int:
    # Conservative per-grid-step working-set budgets, kept below each
    # generation's scoped-VMEM default (16 MiB v5e, 32 MiB v6e, 32-of-64 v7x).
    if "v5" in kind:
        return 10 << 20
    if "7" in kind:
        return 16 << 20
    return 20 << 20


def _scoped_vmem_default(kind: str) -> int:
    return (16 << 20) if "v5" in kind else (32 << 20)


def _vmem_cap(kind: str) -> int:
    # Safe upper bound for vmem_limit_bytes (physical: 128 MiB v5e/v6e, 64 v7x).
    return (48 << 20) if "7" in kind else (100 << 20)


# ---------------------------------------------------------------------------
# Kernels
# ---------------------------------------------------------------------------

def _flash_kernel(vis_ref, txt_ref, wq_ref, bq_ref, wkv_ref, bkv_ref, out_ref,
                  q_sc, m_sc, l_sc, acc_sc):
    """One (batch_tile, key_tile) grid step of cross-modal flash attention."""
    kv = pl.program_id(1)
    Bt, Nq, D = vis_ref.shape
    _, Tk, _ = txt_ref.shape

    # First key step for this batch tile: project queries (1/sqrt(D) already
    # folded into Wq/bq in the wrapper) and reset the online-softmax state.
    @pl.when(kv == 0)
    def _():
        vis2 = vis_ref[...].reshape(Bt * Nq, D).astype(jnp.bfloat16)
        q2 = (jnp.dot(vis2, wq_ref[...], preferred_element_type=jnp.float32)
              + bq_ref[...])
        q_sc[...] = q2.reshape(Bt, Nq, D).astype(jnp.bfloat16)
        m_sc[...] = jnp.full(m_sc.shape, -jnp.inf, m_sc.dtype)
        l_sc[...] = jnp.zeros(l_sc.shape, l_sc.dtype)
        acc_sc[...] = jnp.zeros(acc_sc.shape, acc_sc.dtype)

    # Fused K|V projection of the current key tile (weights arrive as bf16).
    txt2 = txt_ref[...].reshape(Bt * Tk, D).astype(jnp.bfloat16)
    kv2 = (jnp.dot(txt2, wkv_ref[...], preferred_element_type=jnp.float32)
           + bkv_ref[...])
    k3 = kv2[:, :D].reshape(Bt, Tk, D).astype(jnp.bfloat16)
    v3 = kv2[:, D:].reshape(Bt, Tk, D).astype(jnp.bfloat16)

    # Scores for this key tile, contracting on features (no k transpose).
    s = jnp.einsum("bqd,bkd->bqk", q_sc[...], k3,
                   preferred_element_type=jnp.float32)

    # Online-softmax update; normalization deferred to the final key step.
    m_prev = m_sc[...]
    m_new = jnp.maximum(m_prev, jnp.max(s, axis=-1, keepdims=True))
    alpha = jnp.exp(m_prev - m_new)
    p = jnp.exp(s - m_new)
    l_sc[...] = alpha * l_sc[...] + jnp.sum(p, axis=-1, keepdims=True)
    acc_sc[...] = alpha * acc_sc[...] + jnp.einsum(
        "bqk,bkd->bqd", p.astype(jnp.bfloat16), v3,
        preferred_element_type=jnp.float32)
    m_sc[...] = m_new

    @pl.when(kv == pl.num_programs(1) - 1)
    def _():
        # l >= 1 (contains exp(0) at the running max) -> approx reciprocal safe.
        inv_l = pl.reciprocal(l_sc[...], approx=True)
        out_ref[...] = (acc_sc[...] * inv_l).astype(out_ref.dtype)


def _v_proj_kernel(txt_ref, wv_ref, bv_ref, out_ref):
    """Nk == 1 fast path: output == value projection of the single text token."""
    Bt, Nk, D = txt_ref.shape
    x2 = txt_ref[...].reshape(Bt * Nk, D).astype(jnp.bfloat16)
    y = jnp.dot(x2, wv_ref[...], preferred_element_type=jnp.float32) + bv_ref[...]
    out_ref[...] = y.reshape(Bt, Nk, D).astype(out_ref.dtype)


# ---------------------------------------------------------------------------
# Tiling / budget helpers
# ---------------------------------------------------------------------------

def _choose_key_tile(nk: int, max_tile: int = 1024) -> int:
    if nk <= max_tile:
        return nk
    # Partial key blocks must stay sublane-aligned (multiple of 8) and divide Nk
    # exactly so no padded/garbage key rows enter the softmax.
    for t in range(max_tile, 7, -8):
        if nk % t == 0:
            return t
    return nk  # TODO(synk): mask ragged key tiles instead of full-Nk fallback.


def _per_batch_elem_bytes(nq: int, tk: int, d: int) -> int:
    f32, bf16 = 4, 2
    b = 0
    b += 2 * nq * d * f32 * 2            # vision in + out blocks, double-buffered
    b += tk * d * f32 * 2                # text block, double-buffered
    b += nq * d * bf16 + tk * d * bf16   # bf16 activation copies
    b += nq * d * f32 + tk * 2 * d * f32 # q2 / kv2 f32 intermediates
    b += 2 * tk * d * bf16               # k3 / v3 bf16
    b += nq * tk * (f32 + f32 + bf16)    # s, p (f32) + bf16 p copy
    b += nq * d * (bf16 + f32)           # q / acc scratch
    b += 2 * nq * 128 * f32              # m, l scratch (lane-padded to 128)
    return b


def _weight_bytes(d: int) -> int:
    return 3 * d * d * 2 + 3 * d * 4     # bf16 Wq + Wk|Wv, f32 biases


# ---------------------------------------------------------------------------
# Wrappers
# ---------------------------------------------------------------------------

def _pooled_value_projection(text3, params, out_dtype, *, min_steps=1):
    B, Nk, D = text3.shape  # Nk == 1
    wv = params["wv"].astype(jnp.bfloat16)
    bv = params["bv"].reshape(1, D).astype(jnp.float32)

    bt = max(1, B // min_steps)
    while B % bt:
        bt -= 1
    grid = (B // bt,)

    return pl.pallas_call(
        _v_proj_kernel,
        out_shape=jax.ShapeDtypeStruct((B, Nk, D), out_dtype),
        grid_spec=pltpu.PrefetchScalarGridSpec(
            num_scalar_prefetch=0,
            grid=grid,
            in_specs=[
                pl.BlockSpec((bt, Nk, D), lambda b: (b, 0, 0)),
                pl.BlockSpec((D, D), lambda b: (0, 0)),
                pl.BlockSpec((1, D), lambda b: (0, 0)),
            ],
            out_specs=pl.BlockSpec((bt, Nk, D), lambda b: (b, 0, 0)),
        ),
        compiler_params=pltpu.CompilerParams(
            dimension_semantics=("parallel",)),
    )(text3, wv, bv)


def cross_modal_attention(vision_features, text_features, params, *,
                          batch_tile=None, key_tile=None):
    """JAX wrapper matching CrossModalAttention.forward semantics.

    vision_features: (B, Nq, D) or (B, D)
    text_features:   (B, Nk, D) or (B, D)
    params: dict with wq, bq, wk, bk, wv, bv; weights are (D, D) as (in, out).
    Returns tensor shaped like vision_features.
    """
    orig_vis_ndim = vision_features.ndim
    if vision_features.ndim == 2:
        vision_features = vision_features[:, None, :]
    if text_features.ndim == 2:
        text_features = text_features[:, None, :]

    B, Nq, D = vision_features.shape
    Bt_, Nk, Dt_ = text_features.shape
    assert Bt_ == B and Dt_ == D
    out_dtype = vision_features.dtype

    kind = _tpu_kind()
    num_tc = _num_tensorcores(kind)
    min_steps = 2 if (num_tc >= 2 and B >= 2) else 1

    if Nk == 1:
        # Softmax over a single key is identically 1: the output equals the V
        # projection of the (single) text token, broadcast over queries.
        out = _pooled_value_projection(text_features, params, out_dtype,
                                       min_steps=min_steps)
        if Nq > 1:
            out = jnp.broadcast_to(out, (B, Nq, D))
    else:
        scale = 1.0 / math.sqrt(D)
        # Fold 1/sqrt(D) into Wq/bq (one-time parameter transform) and ship all
        # matmul weights as bf16 so the kernel neither scales nor casts them.
        wq = (params["wq"] * scale).astype(jnp.bfloat16)
        bq = (params["bq"] * scale).reshape(1, D).astype(jnp.float32)
        wkv = jnp.concatenate([params["wk"], params["wv"]],
                              axis=1).astype(jnp.bfloat16)          # (D, 2D)
        bkv = jnp.concatenate([params["bk"], params["bv"]]
                              ).reshape(1, 2 * D).astype(jnp.float32)

        if key_tile is None:
            key_tile = _choose_key_tile(Nk)
        key_tile = int(max(1, min(key_tile, Nk)))
        if Nk % key_tile:
            key_tile = Nk
        num_kv = Nk // key_tile

        if batch_tile is None:
            budget = _per_step_vmem_budget(kind)
            per_b = _per_batch_elem_bytes(Nq, key_tile, D)
            batch_tile = max(1, (budget - _weight_bytes(D)) // max(per_b, 1))
        batch_tile = int(max(1, min(batch_tile, B)))
        # Keep >=2 grid steps on the batch axis on v7x so both TCs get work.
        batch_tile = min(batch_tile, max(1, B // min_steps))
        while B % batch_tile:
            batch_tile -= 1
        grid = (B // batch_tile, num_kv)

        est_bytes = (_weight_bytes(D)
                     + batch_tile * _per_batch_elem_bytes(Nq, key_tile, D))
        vmem_limit = None
        if est_bytes > int(0.8 * _scoped_vmem_default(kind)):
            vmem_limit = min(int(1.5 * est_bytes) + (4 << 20), _vmem_cap(kind))

        def _build(weight_pipeline_mode):
            def wspec(shape):
                if weight_pipeline_mode is None:
                    return pl.BlockSpec(shape, lambda b, k: (0, 0))
                return pl.BlockSpec(shape, lambda b, k: (0, 0),
                                    pipeline_mode=weight_pipeline_mode)

            grid_spec = pltpu.PrefetchScalarGridSpec(
                num_scalar_prefetch=0,
                grid=grid,
                in_specs=[
                    pl.BlockSpec((batch_tile, Nq, D),
                                 lambda b, k: (b, 0, 0)),            # vision
                    pl.BlockSpec((batch_tile, key_tile, D),
                                 lambda b, k: (b, k, 0)),             # text tile
                    wspec((D, D)),                                    # Wq (scaled)
                    wspec((1, D)),                                    # bq (scaled)
                    wspec((D, 2 * D)),                                # Wk|Wv
                    wspec((1, 2 * D)),                                # bk|bv
                ],
                out_specs=pl.BlockSpec((batch_tile, Nq, D),
                                       lambda b, k: (b, 0, 0)),
                scratch_shapes=[
                    pltpu.VMEM((batch_tile, Nq, D), jnp.bfloat16),    # q
                    pltpu.VMEM((batch_tile, Nq, 1), jnp.float32),     # m
                    pltpu.VMEM((batch_tile, Nq, 1), jnp.float32),     # l
                    pltpu.VMEM((batch_tile, Nq, D), jnp.float32),     # acc
                ],
            )
            return pl.pallas_call(
                _flash_kernel,
                out_shape=jax.ShapeDtypeStruct((B, Nq, D), out_dtype),
                grid_spec=grid_spec,
                compiler_params=pltpu.CompilerParams(
                    dimension_semantics=("parallel", "arbitrary"),
                    vmem_limit_bytes=vmem_limit,
                ),
            )

        args = (vision_features, text_features, wq, bq, wkv, bkv)
        try:
            # Resident weights: constant block index across the grid, so a
            # single buffer is enough (frees VMEM for larger batch tiles).
            out = _build(pl.Buffered(1))(*args)
        except Exception:
            # Fallback if this JAX build rejects pipeline_mode / Buffered(1).
            out = _build(None)(*args)

    if orig_vis_ndim == 2 and out.shape[1] == 1:
        out = out[:, 0, :]
    return out


# ---------------------------------------------------------------------------
# Params / reference / test
# ---------------------------------------------------------------------------

def init_params(key, dim):
    """Deterministic init mimicking nn.Linear's uniform(-1/sqrt(dim), 1/sqrt(dim))."""
    ks = jax.random.split(key, 6)
    bound = 1.0 / math.sqrt(dim)
    u = lambda k, shape: jax.random.uniform(k, shape, jnp.float32, -bound, bound)
    return {
        "wq": u(ks[0], (dim, dim)), "bq": u(ks[1], (dim,)),
        "wk": u(ks[2], (dim, dim)), "bk": u(ks[3], (dim,)),
        "wv": u(ks[4], (dim, dim)), "bv": u(ks[5], (dim,)),
    }


def reference(vision_features, text_features, params):
    """Plain-JAX f32 reference implementing the same math (for verification)."""
    orig_ndim = vision_features.ndim
    if vision_features.ndim == 2:
        vision_features = vision_features[:, None, :]
    if text_features.ndim == 2:
        text_features = text_features[:, None, :]
    D = vision_features.shape[-1]
    q = vision_features @ params["wq"] + params["bq"]
    k = text_features @ params["wk"] + params["bk"]
    v = text_features @ params["wv"] + params["bv"]
    scores = jnp.einsum("bqd,bkd->bqk", q, k) / math.sqrt(D)
    w = jax.nn.softmax(scores, axis=-1)
    out = jnp.einsum("bqk,bkd->bqd", w, v)
    if orig_ndim == 2 and out.shape[1] == 1:
        out = out[:, 0, :]
    return out


if __name__ == "__main__":
    key = jax.random.PRNGKey(0)
    k_param, k_vis, k_txt, k_vis2, k_txt2 = jax.random.split(key, 5)

    dim = 32
    batch = 2
    num_vis_tokens = 8
    num_txt_tokens = 8

    params = init_params(k_param, dim)

    # Tolerance relaxed vs pure-f32: bf16 matmul operands (f32 accumulation),
    # pre-scaled Wq and an approx reciprocal in the softmax epilogue.
    ATOL = 3e-2
    RTOL = 3e-2

    # Token-level (3D) case -> flash kernel.
    vision = jax.random.normal(k_vis, (batch, num_vis_tokens, dim), jnp.float32)
    text = jax.random.normal(k_txt, (batch, num_txt_tokens, dim), jnp.float32)
    out3d = cross_modal_attention(vision, text, params)
    out3d = jax.block_until_ready(out3d)
    ref3d = reference(vision, text, params)
    assert out3d.shape == vision.shape
    assert jnp.allclose(out3d, ref3d, atol=ATOL, rtol=RTOL)

    # Pooled (2D) case -> Nk == 1 fast path (single V-projection kernel).
    vision2 = jax.random.normal(k_vis2, (batch, dim), jnp.float32)
    text2 = jax.random.normal(k_txt2, (batch, dim), jnp.float32)
    out2d = cross_modal_attention(vision2, text2, params)
    out2d = jax.block_until_ready(out2d)
    ref2d = reference(vision2, text2, params)
    assert out2d.shape == vision2.shape
    assert jnp.allclose(out2d, ref2d, atol=ATOL, rtol=RTOL)

    print("KERNEL_OK")
</pallas_src>

<mosaic_0001>
module attributes {stable_mosaic.version = 11 : i64} {
  func.func @_flash_kernel(%arg0: i32, %arg1: i32, %arg2: memref<2x8x32xf32, #tpu.memory_space<vmem>>, %arg3: memref<2x8x32xf32, #tpu.memory_space<vmem>>, %arg4: memref<32x32xbf16, #tpu.memory_space<vmem>>, %arg5: memref<1x32xf32, #tpu.memory_space<vmem>>, %arg6: memref<32x64xbf16, #tpu.memory_space<vmem>>, %arg7: memref<1x64xf32, #tpu.memory_space<vmem>>, %arg8: memref<2x8x32xf32, #tpu.memory_space<vmem>>, %arg9: memref<2x8x32xbf16, #tpu.memory_space<vmem>>, %arg10: memref<2x8x1xf32, #tpu.memory_space<vmem>>, %arg11: memref<2x8x1xf32, #tpu.memory_space<vmem>>, %arg12: memref<2x8x32xf32, #tpu.memory_space<vmem>>) attributes {dimension_semantics = [#tpu.dimension_semantics<parallel>, #tpu.dimension_semantics<arbitrary>], iteration_bounds = array<i64: 1, 1>, scalar_prefetch = 0 : i64, scratch_operands = 4 : i64, tpu.core_type = #tpu.core_type<tc>, window_params = [{transform_indices = @transform_0, window_bounds = array<i64: 2, 8, 32>}, {transform_indices = @transform_1, window_bounds = array<i64: 2, 8, 32>}, {pipeline_mode = #tpu.pipeline_mode<synchronous>, transform_indices = @transform_2, window_bounds = array<i64: 32, 32>}, {pipeline_mode = #tpu.pipeline_mode<synchronous>, transform_indices = @transform_3, window_bounds = array<i64: 1, 32>}, {pipeline_mode = #tpu.pipeline_mode<synchronous>, transform_indices = @transform_4, window_bounds = array<i64: 32, 64>}, {pipeline_mode = #tpu.pipeline_mode<synchronous>, transform_indices = @transform_5, window_bounds = array<i64: 1, 64>}, {transform_indices = @transform_6, window_bounds = array<i64: 2, 8, 32>}]} {
    %c0_i32 = arith.constant 0 : i32
    %0 = arith.cmpi eq, %arg1, %c0_i32 : i32
    %1 = arith.extui %0 : i1 to i32
    %c0_i32_0 = arith.constant 0 : i32
    %2 = arith.cmpi ne, %1, %c0_i32_0 : i32
    scf.if %2 {
      %c0_34 = arith.constant 0 : index
      %c0_35 = arith.constant 0 : index
      %c0_36 = arith.constant 0 : index
      %45 = vector.load %arg2[%c0_34, %c0_35, %c0_36] : memref<2x8x32xf32, #tpu.memory_space<vmem>>, vector<2x8x32xf32>
      %46 = vector.shape_cast %45 : vector<2x8x32xf32> to vector<16x32xf32>
      %47 = arith.truncf %46 : vector<16x32xf32> to vector<16x32xbf16>
      %c0_37 = arith.constant 0 : index
      %c0_38 = arith.constant 0 : index
      %48 = vector.load %arg4[%c0_37, %c0_38] : memref<32x32xbf16, #tpu.memory_space<vmem>>, vector<32x32xbf16>
      %cst_39 = arith.constant dense<0.000000e+00> : vector<16x32xf32>
      %49 = tpu.matmul %47, %48, %cst_39 {dimension_numbers = #tpu.dot_dimension_numbers<[1], [0], [0], [1], [0, 0, 1, 1], [], []>} : vector<16x32xbf16>, vector<32x32xbf16>, vector<16x32xf32> -> vector<16x32xf32>
      %c0_40 = arith.constant 0 : index
      %c0_41 = arith.constant 0 : index
      %50 = vector.load %arg5[%c0_40, %c0_41] : memref<1x32xf32, #tpu.memory_space<vmem>>, vector<1x32xf32>
      %51 = vector.broadcast %50 : vector<1x32xf32> to vector<16x32xf32>
      %52 = arith.addf %49, %51 : vector<16x32xf32>
      %53 = vector.shape_cast %52 : vector<16x32xf32> to vector<2x8x32xf32>
      %54 = arith.truncf %53 : vector<2x8x32xf32> to vector<2x8x32xbf16>
      %c0_42 = arith.constant 0 : index
      %c0_43 = arith.constant 0 : index
      %c0_44 = arith.constant 0 : index
      %55 = vector.load %arg9[%c0_42, %c0_43, %c0_44] : memref<2x8x32xbf16, #tpu.memory_space<vmem>>, vector<2x8x32xbf16>
      tpu.vector_store %arg9[%c0_42, %c0_43, %c0_44], %54 {strides = array<i32>} : memref<2x8x32xbf16, #tpu.memory_space<vmem>>, vector<2x8x32xbf16>,
      %cst_45 = arith.constant 0xFF800000 : f32
      %56 = vector.broadcast %cst_45 : f32 to vector<2x8x1xf32>
      %c0_46 = arith.constant 0 : index
      %c0_47 = arith.constant 0 : index
      %c0_48 = arith.constant 0 : index
      %57 = vector.load %arg10[%c0_46, %c0_47, %c0_48] : memref<2x8x1xf32, #tpu.memory_space<vmem>>, vector<2x8x1xf32>
      tpu.vector_store %arg10[%c0_46, %c0_47, %c0_48], %56 {strides = array<i32>} : memref<2x8x1xf32, #tpu.memory_space<vmem>>, vector<2x8x1xf32>,
      %cst_49 = arith.constant 0.000000e+00 : f32
      %58 = vector.broadcast %cst_49 : f32 to vector<2x8x1xf32>
      %c0_50 = arith.constant 0 : index
      %c0_51 = arith.constant 0 : index
      %c0_52 = arith.constant 0 : index
      %59 = vector.load %arg11[%c0_50, %c0_51, %c0_52] : memref<2x8x1xf32, #tpu.memory_space<vmem>>, vector<2x8x1xf32>
      tpu.vector_store %arg11[%c0_50, %c0_51, %c0_52], %58 {strides = array<i32>} : memref<2x8x1xf32, #tpu.memory_space<vmem>>, vector<2x8x1xf32>,
      %cst_53 = arith.constant 0.000000e+00 : f32
      %60 = vector.broadcast %cst_53 : f32 to vector<2x8x32xf32>
      %c0_54 = arith.constant 0 : index
      %c0_55 = arith.constant 0 : index
      %c0_56 = arith.constant 0 : index
      %61 = vector.load %arg12[%c0_54, %c0_55, %c0_56] : memref<2x8x32xf32, #tpu.memory_space<vmem>>, vector<2x8x32xf32>
      tpu.vector_store %arg12[%c0_54, %c0_55, %c0_56], %60 {strides = array<i32>} : memref<2x8x32xf32, #tpu.memory_space<vmem>>, vector<2x8x32xf32>,
    } else {
    }
    %c0 = arith.constant 0 : index
    %c0_1 = arith.constant 0 : index
    %c0_2 = arith.constant 0 : index
    %3 = vector.load %arg3[%c0, %c0_1, %c0_2] : memref<2x8x32xf32, #tpu.memory_space<vmem>>, vector<2x8x32xf32>
    %4 = vector.shape_cast %3 : vector<2x8x32xf32> to vector<16x32xf32>
    %5 = arith.truncf %4 : vector<16x32xf32> to vector<16x32xbf16>
    %c0_3 = arith.constant 0 : index
    %c0_4 = arith.constant 0 : index
    %6 = vector.load %arg6[%c0_3, %c0_4] : memref<32x64xbf16, #tpu.memory_space<vmem>>, vector<32x64xbf16>
    %cst = arith.constant dense<0.000000e+00> : vector<16x64xf32>
    %7 = tpu.matmul %5, %6, %cst {dimension_numbers = #tpu.dot_dimension_numbers<[1], [0], [0], [1], [0, 0, 1, 1], [], []>} : vector<16x32xbf16>, vector<32x64xbf16>, vector<16x64xf32> -> vector<16x64xf32>
    %c0_5 = arith.constant 0 : index
    %c0_6 = arith.constant 0 : index
    %8 = vector.load %arg7[%c0_5, %c0_6] : memref<1x64xf32, #tpu.memory_space<vmem>>, vector<1x64xf32>
    %9 = vector.broadcast %8 : vector<1x64xf32> to vector<16x64xf32>
    %10 = arith.addf %7, %9 : vector<16x64xf32>
    %11 = vector.extract_strided_slice %10 {offsets = [0, 0], sizes = [16, 32], strides = [1, 1]} : vector<16x64xf32> to vector<16x32xf32>
    %12 = vector.shape_cast %11 : vector<16x32xf32> to vector<2x8x32xf32>
    %13 = arith.truncf %12 : vector<2x8x32xf32> to vector<2x8x32xbf16>
    %14 = vector.extract_strided_slice %10 {offsets = [0, 32], sizes = [16, 32], strides = [1, 1]} : vector<16x64xf32> to vector<16x32xf32>
    %15 = vector.shape_cast %14 : vector<16x32xf32> to vector<2x8x32xf32>
    %16 = arith.truncf %15 : vector<2x8x32xf32> to vector<2x8x32xbf16>
    %c0_7 = arith.constant 0 : index
    %c0_8 = arith.constant 0 : index
    %c0_9 = arith.constant 0 : index
    %17 = vector.load %arg9[%c0_7, %c0_8, %c0_9] : memref<2x8x32xbf16, #tpu.memory_space<vmem>>, vector<2x8x32xbf16>
    "tpu.trace_start"() <{level = 10 : i32, message = "bqd,bkd->bqk"}> : () -> ()
    %cst_10 = arith.constant dense<0.000000e+00> : vector<2x8x8xf32>
    %18 = tpu.matmul %17, %13, %cst_10 {dimension_numbers = #tpu.dot_dimension_numbers<[2], [2], [1], [1], [0, 0, 0, 1, 1, 1], [0], [0]>} : vector<2x8x32xbf16>, vector<2x8x32xbf16>, vector<2x8x8xf32> -> vector<2x8x8xf32>
    "tpu.trace_stop"() : () -> ()
    %c0_11 = arith.constant 0 : index
    %c0_12 = arith.constant 0 : index
    %c0_13 = arith.constant 0 : index
    %19 = vector.load %arg10[%c0_11, %c0_12, %c0_13] : memref<2x8x1xf32, #tpu.memory_space<vmem>>, vector<2x8x1xf32>
    %cst_14 = arith.constant dense<0xFF800000> : vector<2x8xf32>
    %20 = vector.multi_reduction <maximumf>, %18, %cst_14 [2] : vector<2x8x8xf32> to vector<2x8xf32>
    %21 = vector.shape_cast %20 : vector<2x8xf32> to vector<2x8x1xf32>
    %22 = arith.maximumf %19, %21 : vector<2x8x1xf32>
    %23 = arith.subf %19, %22 : vector<2x8x1xf32>
    %24 = math.exp %23 : vector<2x8x1xf32>
    %25 = vector.broadcast %22 : vector<2x8x1xf32> to vector<2x8x8xf32>
    %26 = arith.subf %18, %25 : vector<2x8x8xf32>
    %27 = math.exp %26 : vector<2x8x8xf32>
    %c0_15 = arith.constant 0 : index
    %c0_16 = arith.constant 0 : index
    %c0_17 = arith.constant 0 : index
    %28 = vector.load %arg11[%c0_15, %c0_16, %c0_17] : memref<2x8x1xf32, #tpu.memory_space<vmem>>, vector<2x8x1xf32>
    %29 = arith.mulf %24, %28 : vector<2x8x1xf32>
    %cst_18 = arith.constant dense<0.000000e+00> : vector<2x8xf32>
    %30 = vector.multi_reduction <add>, %27, %cst_18 [2] : vector<2x8x8xf32> to vector<2x8xf32>
    %31 = vector.shape_cast %30 : vector<2x8xf32> to vector<2x8x1xf32>
    %32 = arith.addf %29, %31 : vector<2x8x1xf32>
    %c0_19 = arith.constant 0 : index
    %c0_20 = arith.constant 0 : index
    %c0_21 = arith.constant 0 : index
    %33 = vector.load %arg11[%c0_19, %c0_20, %c0_21] : memref<2x8x1xf32, #tpu.memory_space<vmem>>, vector<2x8x1xf32>
    tpu.vector_store %arg11[%c0_19, %c0_20, %c0_21], %32 {strides = array<i32>} : memref<2x8x1xf32, #tpu.memory_space<vmem>>, vector<2x8x1xf32>,
    %c0_22 = arith.constant 0 : index
    %c0_23 = arith.constant 0 : index
    %c0_24 = arith.constant 0 : index
    %34 = vector.load %arg12[%c0_22, %c0_23, %c0_24] : memref<2x8x32xf32, #tpu.memory_space<vmem>>, vector<2x8x32xf32>
    %35 = vector.broadcast %24 : vector<2x8x1xf32> to vector<2x8x32xf32>
    %36 = arith.mulf %35, %34 : vector<2x8x32xf32>
    %37 = arith.truncf %27 : vector<2x8x8xf32> to vector<2x8x8xbf16>
    "tpu.trace_start"() <{level = 10 : i32, message = "bqk,bkd->bqd"}> : () -> ()
    %cst_25 = arith.constant dense<0.000000e+00> : vector<2x8x32xf32>
    %38 = tpu.matmul %37, %16, %cst_25 {dimension_numbers = #tpu.dot_dimension_numbers<[2], [1], [1], [2], [0, 0, 0, 1, 1, 2], [0], [0]>} : vector<2x8x8xbf16>, vector<2x8x32xbf16>, vector<2x8x32xf32> -> vector<2x8x32xf32>
    "tpu.trace_stop"() : () -> ()
    %39 = arith.addf %36, %38 : vector<2x8x32xf32>
    %c0_26 = arith.constant 0 : index
    %c0_27 = arith.constant 0 : index
    %c0_28 = arith.constant 0 : index
    %40 = vector.load %arg12[%c0_26, %c0_27, %c0_28] : memref<2x8x32xf32, #tpu.memory_space<vmem>>, vector<2x8x32xf32>
    tpu.vector_store %arg12[%c0_26, %c0_27, %c0_28], %39 {strides = array<i32>} : memref<2x8x32xf32, #tpu.memory_space<vmem>>, vector<2x8x32xf32>,
    %c0_29 = arith.constant 0 : index
    %c0_30 = arith.constant 0 : index
    %c0_31 = arith.constant 0 : index
    %41 = vector.load %arg10[%c0_29, %c0_30, %c0_31] : memref<2x8x1xf32, #tpu.memory_space<vmem>>, vector<2x8x1xf32>
    tpu.vector_store %arg10[%c0_29, %c0_30, %c0_31], %22 {strides = array<i32>} : memref<2x8x1xf32, #tpu.memory_space<vmem>>, vector<2x8x1xf32>,
    %c0_i32_32 = arith.constant 0 : i32
    %42 = arith.cmpi eq, %arg1, %c0_i32_32 : i32
    %43 = arith.extui %42 : i1 to i32
    %c0_i32_33 = arith.constant 0 : i32
    %44 = arith.cmpi ne, %43, %c0_i32_33 : i32
    scf.if %44 {
      %c0_34 = arith.constant 0 : index
      %c0_35 = arith.constant 0 : index
      %c0_36 = arith.constant 0 : index
      %45 = vector.load %arg11[%c0_34, %c0_35, %c0_36] : memref<2x8x1xf32, #tpu.memory_space<vmem>>, vector<2x8x1xf32>
      %46 = tpu.reciprocal %45 {approx = true} : vector<2x8x1xf32> -> vector<2x8x1xf32>
      %c0_37 = arith.constant 0 : index
      %c0_38 = arith.constant 0 : index
      %c0_39 = arith.constant 0 : index
      %47 = vector.load %arg12[%c0_37, %c0_38, %c0_39] : memref<2x8x32xf32, #tpu.memory_space<vmem>>, vector<2x8x32xf32>
      %48 = vector.broadcast %46 : vector<2x8x1xf32> to vector<2x8x32xf32>
      %49 = arith.mulf %47, %48 : vector<2x8x32xf32>
      %c0_40 = arith.constant 0 : index
      %c0_41 = arith.constant 0 : index
      %c0_42 = arith.constant 0 : index
      %50 = vector.load %arg8[%c0_40, %c0_41, %c0_42] : memref<2x8x32xf32, #tpu.memory_space<vmem>>, vector<2x8x32xf32>
      tpu.vector_store %arg8[%c0_40, %c0_41, %c0_42], %49 {strides = array<i32>} : memref<2x8x32xf32, #tpu.memory_space<vmem>>, vector<2x8x32xf32>,
    } else {
    }
    return
  }
  func.func @transform_0(%arg0: i32, %arg1: i32) -> (i32, i32, i32) {
    %c0_i32 = arith.constant 0 : i32
    %c0_i32_0 = arith.constant 0 : i32
    %c0_i32_1 = arith.constant 0 : i32
    return %arg0, %c0_i32, %c0_i32_0 : i32, i32, i32
  }
  func.func @transform_1(%arg0: i32, %arg1: i32) -> (i32, i32, i32) {
    %c0_i32 = arith.constant 0 : i32
    %c0_i32_0 = arith.constant 0 : i32
    return %arg0, %arg1, %c0_i32 : i32, i32, i32
  }
  func.func @transform_2(%arg0: i32, %arg1: i32) -> (i32, i32) {
    %c0_i32 = arith.constant 0 : i32
    %c0_i32_0 = arith.constant 0 : i32
    %c0_i32_1 = arith.constant 0 : i32
    return %c0_i32, %c0_i32_0 : i32, i32
  }
  func.func @transform_3(%arg0: i32, %arg1: i32) -> (i32, i32) {
    %c0_i32 = arith.constant 0 : i32
    %c0_i32_0 = arith.constant 0 : i32
    %c0_i32_1 = arith.constant 0 : i32
    return %c0_i32, %c0_i32_0 : i32, i32
  }
  func.func @transform_4(%arg0: i32, %arg1: i32) -> (i32, i32) {
    %c0_i32 = arith.constant 0 : i32
    %c0_i32_0 = arith.constant 0 : i32
    %c0_i32_1 = arith.constant 0 : i32
    return %c0_i32, %c0_i32_0 : i32, i32
  }
  func.func @transform_5(%arg0: i32, %arg1: i32) -> (i32, i32) {
    %c0_i32 = arith.constant 0 : i32
    %c0_i32_0 = arith.constant 0 : i32
    %c0_i32_1 = arith.constant 0 : i32
    return %c0_i32, %c0_i32_0 : i32, i32
  }
  func.func @transform_6(%arg0: i32, %arg1: i32) -> (i32, i32, i32) {
    %c0_i32 = arith.constant 0 : i32
    %c0_i32_0 = arith.constant 0 : i32
    %c0_i32_1 = arith.constant 0 : i32
    return %arg0, %c0_i32, %c0_i32_0 : i32, i32, i32
  }
}

module attributes {stable_mosaic.version = 11 : i64} {
  func.func @_flash_kernel(%arg0: i32, %arg1: i32, %arg2: memref<2x8x32xf32, #tpu.memory_space<vmem>>, %arg3: memref<2x8x32xf32, #tpu.memory_space<vmem>>, %arg4: memref<32x32xbf16, #tpu.memory_space<vmem>>, %arg5: memref<1x32xf32, #tpu.memory_space<vmem>>, %arg6: memref<32x64xbf16, #tpu.memory_space<vmem>>, %arg7: memref<1x64xf32, #tpu.memory_space<vmem>>, %arg8: memref<2x8x32xf32, #tpu.memory_space<vmem>>, %arg9: memref<2x8x32xbf16, #tpu.memory_space<vmem>>, %arg10: memref<2x8x1xf32, #tpu.memory_space<vmem>>, %arg11: memref<2x8x1xf32, #tpu.memory_space<vmem>>, %arg12: memref<2x8x32xf32, #tpu.memory_space<vmem>>) attributes {dimension_semantics = [#tpu.dimension_semantics<parallel>, #tpu.dimension_semantics<arbitrary>], iteration_bounds = array<i64: 1, 1>, scalar_prefetch = 0 : i64, scratch_operands = 4 : i64, tpu.core_type = #tpu.core_type<tc>, window_params = [{transform_indices = @transform_0, window_bounds = array<i64: 2, 8, 32>}, {transform_indices = @transform_1, window_bounds = array<i64: 2, 8, 32>}, {pipeline_mode = #tpu.pipeline_mode<synchronous>, transform_indices = @transform_2, window_bounds = array<i64: 32, 32>}, {pipeline_mode = #tpu.pipeline_mode<synchronous>, transform_indices = @transform_3, window_bounds = array<i64: 1, 32>}, {pipeline_mode = #tpu.pipeline_mode<synchronous>, transform_indices = @transform_4, window_bounds = array<i64: 32, 64>}, {pipeline_mode = #tpu.pipeline_mode<synchronous>, transform_indices = @transform_5, window_bounds = array<i64: 1, 64>}, {transform_indices = @transform_6, window_bounds = array<i64: 2, 8, 32>}]} {
    %c0_i32 = arith.constant 0 : i32
    %0 = arith.cmpi eq, %arg1, %c0_i32 : i32
    %1 = arith.extui %0 : i1 to i32
    %c0_i32_0 = arith.constant 0 : i32
    %2 = arith.cmpi ne, %1, %c0_i32_0 : i32
    scf.if %2 {
      %c0_34 = arith.constant 0 : index
      %c0_35 = arith.constant 0 : index
      %c0_36 = arith.constant 0 : index
      %45 = vector.load %arg2[%c0_34, %c0_35, %c0_36] : memref<2x8x32xf32, #tpu.memory_space<vmem>>, vector<2x8x32xf32>
      %46 = vector.shape_cast %45 : vector<2x8x32xf32> to vector<16x32xf32>
      %47 = arith.truncf %46 : vector<16x32xf32> to vector<16x32xbf16>
      %c0_37 = arith.constant 0 : index
      %c0_38 = arith.constant 0 : index
      %48 = vector.load %arg4[%c0_37, %c0_38] : memref<32x32xbf16, #tpu.memory_space<vmem>>, vector<32x32xbf16>
      %cst_39 = arith.constant dense<0.000000e+00> : vector<16x32xf32>
      %49 = tpu.matmul %47, %48, %cst_39 {dimension_numbers = #tpu.dot_dimension_numbers<[1], [0], [0], [1], [0, 0, 1, 1], [], []>} : vector<16x32xbf16>, vector<32x32xbf16>, vector<16x32xf32> -> vector<16x32xf32>
      %c0_40 = arith.constant 0 : index
      %c0_41 = arith.constant 0 : index
      %50 = vector.load %arg5[%c0_40, %c0_41] : memref<1x32xf32, #tpu.memory_space<vmem>>, vector<1x32xf32>
      %51 = vector.broadcast %50 : vector<1x32xf32> to vector<16x32xf32>
      %52 = arith.addf %49, %51 : vector<16x32xf32>
      %53 = vector.shape_cast %52 : vector<16x32xf32> to vector<2x8x32xf32>
      %54 = arith.truncf %53 : vector<2x8x32xf32> to vector<2x8x32xbf16>
      %c0_42 = arith.constant 0 : index
      %c0_43 = arith.constant 0 : index
      %c0_44 = arith.constant 0 : index
      %55 = vector.load %arg9[%c0_42, %c0_43, %c0_44] : memref<2x8x32xbf16, #tpu.memory_space<vmem>>, vector<2x8x32xbf16>
      tpu.vector_store %arg9[%c0_42, %c0_43, %c0_44], %54 {strides = array<i32>} : memref<2x8x32xbf16, #tpu.memory_space<vmem>>, vector<2x8x32xbf16>,
      %cst_45 = arith.constant 0xFF800000 : f32
      %56 = vector.broadcast %cst_45 : f32 to vector<2x8x1xf32>
      %c0_46 = arith.constant 0 : index
      %c0_47 = arith.constant 0 : index
      %c0_48 = arith.constant 0 : index
      %57 = vector.load %arg10[%c0_46, %c0_47, %c0_48] : memref<2x8x1xf32, #tpu.memory_space<vmem>>, vector<2x8x1xf32>
      tpu.vector_store %arg10[%c0_46, %c0_47, %c0_48], %56 {strides = array<i32>} : memref<2x8x1xf32, #tpu.memory_space<vmem>>, vector<2x8x1xf32>,
      %cst_49 = arith.constant 0.000000e+00 : f32
      %58 = vector.broadcast %cst_49 : f32 to vector<2x8x1xf32>
      %c0_50 = arith.constant 0 : index
      %c0_51 = arith.constant 0 : index
      %c0_52 = arith.constant 0 : index
      %59 = vector.load %arg11[%c0_50, %c0_51, %c0_52] : memref<2x8x1xf32, #tpu.memory_space<vmem>>, vector<2x8x1xf32>
      tpu.vector_store %arg11[%c0_50, %c0_51, %c0_52], %58 {strides = array<i32>} : memref<2x8x1xf32, #tpu.memory_space<vmem>>, vector<2x8x1xf32>,
      %cst_53 = arith.constant 0.000000e+00 : f32
      %60 = vector.broadcast %cst_53 : f32 to vector<2x8x32xf32>
      %c0_54 = arith.constant 0 : index
      %c0_55 = arith.constant 0 : index
      %c0_56 = arith.constant 0 : index
      %61 = vector.load %arg12[%c0_54, %c0_55, %c0_56] : memref<2x8x32xf32, #tpu.memory_space<vmem>>, vector<2x8x32xf32>
      tpu.vector_store %arg12[%c0_54, %c0_55, %c0_56], %60 {strides = array<i32>} : memref<2x8x32xf32, #tpu.memory_space<vmem>>, vector<2x8x32xf32>,
    } else {
    }
    %c0 = arith.constant 0 : index
    %c0_1 = arith.constant 0 : index
    %c0_2 = arith.constant 0 : index
    %3 = vector.load %arg3[%c0, %c0_1, %c0_2] : memref<2x8x32xf32, #tpu.memory_space<vmem>>, vector<2x8x32xf32>
    %4 = vector.shape_cast %3 : vector<2x8x32xf32> to vector<16x32xf32>
    %5 = arith.truncf %4 : vector<16x32xf32> to vector<16x32xbf16>
    %c0_3 = arith.constant 0 : index
    %c0_4 = arith.constant 0 : index
    %6 = vector.load %arg6[%c0_3, %c0_4] : memref<32x64xbf16, #tpu.memory_space<vmem>>, vector<32x64xbf16>
    %cst = arith.constant dense<0.000000e+00> : vector<16x64xf32>
    %7 = tpu.matmul %5, %6, %cst {dimension_numbers = #tpu.dot_dimension_numbers<[1], [0], [0], [1], [0, 0, 1, 1], [], []>} : vector<16x32xbf16>, vector<32x64xbf16>, vector<16x64xf32> -> vector<16x64xf32>
    %c0_5 = arith.constant 0 : index
    %c0_6 = arith.constant 0 : index
    %8 = vector.load %arg7[%c0_5, %c0_6] : memref<1x64xf32, #tpu.memory_space<vmem>>, vector<1x64xf32>
    %9 = vector.broadcast %8 : vector<1x64xf32> to vector<16x64xf32>
    %10 = arith.addf %7, %9 : vector<16x64xf32>
    %11 = vector.extract_strided_slice %10 {offsets = [0, 0], sizes = [16, 32], strides = [1, 1]} : vector<16x64xf32> to vector<16x32xf32>
    %12 = vector.shape_cast %11 : vector<16x32xf32> to vector<2x8x32xf32>
    %13 = arith.truncf %12 : vector<2x8x32xf32> to vector<2x8x32xbf16>
    %14 = vector.extract_strided_slice %10 {offsets = [0, 32], sizes = [16, 32], strides = [1, 1]} : vector<16x64xf32> to vector<16x32xf32>
    %15 = vector.shape_cast %14 : vector<16x32xf32> to vector<2x8x32xf32>
    %16 = arith.truncf %15 : vector<2x8x32xf32> to vector<2x8x32xbf16>
    %c0_7 = arith.constant 0 : index
    %c0_8 = arith.constant 0 : index
    %c0_9 = arith.constant 0 : index
    %17 = vector.load %arg9[%c0_7, %c0_8, %c0_9] : memref<2x8x32xbf16, #tpu.memory_space<vmem>>, vector<2x8x32xbf16>
    "tpu.trace_start"() <{level = 10 : i32, message = "bqd,bkd->bqk"}> : () -> ()
    %cst_10 = arith.constant dense<0.000000e+00> : vector<2x8x8xf32>
    %18 = tpu.matmul %17, %13, %cst_10 {dimension_numbers = #tpu.dot_dimension_numbers<[2], [2], [1], [1], [0, 0, 0, 1, 1, 1], [0], [0]>} : vector<2x8x32xbf16>, vector<2x8x32xbf16>, vector<2x8x8xf32> -> vector<2x8x8xf32>
    "tpu.trace_stop"() : () -> ()
    %c0_11 = arith.constant 0 : index
    %c0_12 = arith.constant 0 : index
    %c0_13 = arith.constant 0 : index
    %19 = vector.load %arg10[%c0_11, %c0_12, %c0_13] : memref<2x8x1xf32, #tpu.memory_space<vmem>>, vector<2x8x1xf32>
    %cst_14 = arith.constant dense<0xFF800000> : vector<2x8xf32>
    %20 = vector.multi_reduction <maximumf>, %18, %cst_14 [2] : vector<2x8x8xf32> to vector<2x8xf32>
    %21 = vector.shape_cast %20 : vector<2x8xf32> to vector<2x8x1xf32>
    %22 = arith.maximumf %19, %21 : vector<2x8x1xf32>
    %23 = arith.subf %19, %22 : vector<2x8x1xf32>
    %24 = math.exp %23 : vector<2x8x1xf32>
    %25 = vector.broadcast %22 : vector<2x8x1xf32> to vector<2x8x8xf32>
    %26 = arith.subf %18, %25 : vector<2x8x8xf32>
    %27 = math.exp %26 : vector<2x8x8xf32>
    %c0_15 = arith.constant 0 : index
    %c0_16 = arith.constant 0 : index
    %c0_17 = arith.constant 0 : index
    %28 = vector.load %arg11[%c0_15, %c0_16, %c0_17] : memref<2x8x1xf32, #tpu.memory_space<vmem>>, vector<2x8x1xf32>
    %29 = arith.mulf %24, %28 : vector<2x8x1xf32>
    %cst_18 = arith.constant dense<0.000000e+00> : vector<2x8xf32>
    %30 = vector.multi_reduction <add>, %27, %cst_18 [2] : vector<2x8x8xf32> to vector<2x8xf32>
    %31 = vector.shape_cast %30 : vector<2x8xf32> to vector<2x8x1xf32>
    %32 = arith.addf %29, %31 : vector<2x8x1xf32>
    %c0_19 = arith.constant 0 : index
    %c0_20 = arith.constant 0 : index
    %c0_21 = arith.constant 0 : index
    %33 = vector.load %arg11[%c0_19, %c0_20, %c0_21] : memref<2x8x1xf32, #tpu.memory_space<vmem>>, vector<2x8x1xf32>
    tpu.vector_store %arg11[%c0_19, %c0_20, %c0_21], %32 {strides = array<i32>} : memref<2x8x1xf32, #tpu.memory_space<vmem>>, vector<2x8x1xf32>,
    %c0_22 = arith.constant 0 : index
    %c0_23 = arith.constant 0 : index
    %c0_24 = arith.constant 0 : index
    %34 = vector.load %arg12[%c0_22, %c0_23, %c0_24] : memref<2x8x32xf32, #tpu.memory_space<vmem>>, vector<2x8x32xf32>
    %35 = vector.broadcast %24 : vector<2x8x1xf32> to vector<2x8x32xf32>
    %36 = arith.mulf %35, %34 : vector<2x8x32xf32>
    %37 = arith.truncf %27 : vector<2x8x8xf32> to vector<2x8x8xbf16>
    "tpu.trace_start"() <{level = 10 : i32, message = "bqk,bkd->bqd"}> : () -> ()
    %cst_25 = arith.constant dense<0.000000e+00> : vector<2x8x32xf32>
    %38 = tpu.matmul %37, %16, %cst_25 {dimension_numbers = #tpu.dot_dimension_numbers<[2], [1], [1], [2], [0, 0, 0, 1, 1, 2], [0], [0]>} : vector<2x8x8xbf16>, vector<2x8x32xbf16>, vector<2x8x32xf32> -> vector<2x8x32xf32>
    "tpu.trace_stop"() : () -> ()
    %39 = arith.addf %36, %38 : vector<2x8x32xf32>
    %c0_26 = arith.constant 0 : index
    %c0_27 = arith.constant 0 : index
    %c0_28 = arith.constant 0 : index
    %40 = vector.load %arg12[%c0_26, %c0_27, %c0_28] : memref<2x8x32xf32, #tpu.memory_space<vmem>>, vector<2x8x32xf32>
    tpu.vector_store %arg12[%c0_26, %c0_27, %c0_28], %39 {strides = array<i32>} : memref<2x8x32xf32, #tpu.memory_space<vmem>>, vector<2x8x32xf32>,
    %c0_29 = arith.constant 0 : index
    %c0_30 = arith.constant 0 : index
    %c0_31 = arith.constant 0 : index
    %41 = vector.load %arg10[%c0_29, %c0_30, %c0_31] : memref<2x8x1xf32, #tpu.memory_space<vmem>>, vector<2x8x1xf32>
    tpu.vector_store %arg10[%c0_29, %c0_30, %c0_31], %22 {strides = array<i32>} : memref<2x8x1xf32, #tpu.memory_space<vmem>>, vector<2x8x1xf32>,
    %c0_i32_32 = arith.constant 0 : i32
    %42 = arith.cmpi eq, %arg1, %c0_i32_32 : i32
    %43 = arith.extui %42 : i1 to i32
    %c0_i32_33 = arith.constant 0 : i32
    %44 = arith.cmpi ne, %43, %c0_i32_33 : i32
    scf.if %44 {
      %c0_34 = arith.constant 0 : index
      %c0_35 = arith.constant 0 : index
      %c0_36 = arith.constant 0 : index
      %45 = vector.load %arg11[%c0_34, %c0_35, %c0_36] : memref<2x8x1xf32, #tpu.memory_space<vmem>>, vector<2x8x1xf32>
      %46 = tpu.reciprocal %45 {approx = true} : vector<2x8x1xf32> -> vector<2x8x1xf32>
      %c0_37 = arith.constant 0 : index
      %c0_38 = arith.constant 0 : index
      %c0_39 = arith.constant 0 : index
      %47 = vector.load %arg12[%c0_37, %c0_38, %c0_39] : memref<2x8x32xf32, #tpu.memory_space<vmem>>, vector<2x8x32xf32>
      %48 = vector.broadcast %46 : vector<2x8x1xf32> to vector<2x8x32xf32>
      %49 = arith.mulf %47, %48 : vector<2x8x32xf32>
      %c0_40 = arith.constant 0 : index
      %c0_41 = arith.constant 0 : index
      %c0_42 = arith.constant 0 : index
      %50 = vector.load %arg8[%c0_40, %c0_41, %c0_42] : memref<2x8x32xf32, #tpu.memory_space<vmem>>, vector<2x8x32xf32>
      tpu.vector_store %arg8[%c0_40, %c0_41, %c0_42], %49 {strides = array<i32>} : memref<2x8x32xf32, #tpu.memory_space<vmem>>, vector<2x8x32xf32>,
    } else {
    }
    return
  }
  func.func @transform_0(%arg0: i32, %arg1: i32) -> (i32, i32, i32) {
    %c0_i32 = arith.constant 0 : i32
    %c0_i32_0 = arith.constant 0 : i32
    %c0_i32_1 = arith.constant 0 : i32
    return %arg0, %c0_i32, %c0_i32_0 : i32, i32, i32
  }
  func.func @transform_1(%arg0: i32, %arg1: i32) -> (i32, i32, i32) {
    %c0_i32 = arith.constant 0 : i32
    %c0_i32_0 = arith.constant 0 : i32
    return %arg0, %arg1, %c0_i32 : i32, i32, i32
  }
  func.func @transform_2(%arg0: i32, %arg1: i32) -> (i32, i32) {
    %c0_i32 = arith.constant 0 : i32
    %c0_i32_0 = arith.constant 0 : i32
    %c0_i32_1 = arith.constant 0 : i32
    return %c0_i32, %c0_i32_0 : i32, i32
  }
  func.func @transform_3(%arg0: i32, %arg1: i32) -> (i32, i32) {
    %c0_i32 = arith.constant 0 : i32
    %c0_i32_0 = arith.constant 0 : i32
    %c0_i32_1 = arith.constant 0 : i32
    return %c0_i32, %c0_i32_0 : i32, i32
  }
  func.func @transform_4(%arg0: i32, %arg1: i32) -> (i32, i32) {
    %c0_i32 = arith.constant 0 : i32
    %c0_i32_0 = arith.constant 0 : i32
    %c0_i32_1 = arith.constant 0 : i32
    return %c0_i32, %c0_i32_0 : i32, i32
  }
  func.func @transform_5(%arg0: i32, %arg1: i32) -> (i32, i32) {
    %c0_i32 = arith.constant 0 : i32
    %c0_i32_0 = arith.constant 0 : i32
    %c0_i32_1 = arith.constant 0 : i32
    return %c0_i32, %c0_i32_0 : i32, i32
  }
  func.func @transform_6(%arg0: i32, %arg1: i32) -> (i32, i32, i32) {
    %c0_i32 = arith.constant 0 : i32
    %c0_i32_0 = arith.constant 0 : i32
    %c0_i32_1 = arith.constant 0 : i32
    return %arg0, %c0_i32, %c0_i32_0 : i32, i32, i32
  }
}

</mosaic_0001>

<llo_original>
// kernel: tpu_custom_call.1
$region0: #{tpu_custom_call.1}
  #allocation0 [shape = 'u32[]', space=smem, size = 0x4, offset = 0x4, fixed_abs, tag = 'smem constant byte address 0x4 - core index']
  #allocation1 [shape = 'u32[72,128]{1,0:T(1,128)}', space=vmem, size = 0x9000, scoped, tag = 'internal scratch']
  #allocation2 [shape = 'bf16[2,8,32]{2,1,0:T(8,128)(2,1)}', space=vmem, size = 0x1000, scoped, tag = 'scratch operand']
  #allocation3 [shape = 'f32[2,8,1]{2,1,0:T(8,128)}', space=vmem, size = 0x2000, scoped, tag = 'scratch operand']
  #allocation4 [shape = 'f32[2,8,1]{2,1,0:T(8,128)}', space=vmem, size = 0x2000, scoped, tag = 'scratch operand']
  #allocation5 [shape = 'f32[2,8,32]{2,1,0:T(8,128)}', space=vmem, size = 0x2000, scoped, tag = 'scratch operand']
  %s0 = inlined_call_operand.hbm [shape: f32[2,8,32], index: 0, kind: input, shape index: {}]
  %s1 = inlined_call_operand.hbm [shape: f32[2,8,32], index: 1, kind: input, shape index: {}]
  %s2 = inlined_call_operand.hbm [shape: bf16[32,32], index: 2, kind: input, shape index: {}]
  %s3 = inlined_call_operand.vmem [shape: f32[1,32], index: 3, kind: input, shape index: {}]
  %s4 = inlined_call_operand.hbm [shape: bf16[32,64], index: 4, kind: input, shape index: {}]
  %s5 = inlined_call_operand.vmem [shape: f32[1,64], index: 5, kind: input, shape index: {}]
  %s6 = inlined_call_operand.hbm [shape: f32[2,8,32], index: 6, kind: output, shape index: {}]
  %s7 = sld [smem:[#allocation0]]
  $region58: #{tpu_custom_call.1} parent=0
    _
  %s9 = ssub.s32 1, %s7
  %s10 = scalar_select 0, %s9, %s7
  $region1: #{tpu_custom_call.1} parent=0
    #allocation6 [shape = 'u8[8192]{0}', space=vmem, size = 0x2000, scoped, tag = 'input window, operand 0, single buffered']
    #allocation7 [shape = 's32[1]{0}', space=sflag, size = 0x4, scoped, tag = 'scoped memory for tpu_custom_call.1']
    #allocation8 [shape = 's32[1]{0}', space=sflag, size = 0x4, scoped, tag = 'scoped memory for tpu_custom_call.1']
    #allocation9 [shape = 'u8[8192]{0}', space=vmem, size = 0x2000, scoped, tag = 'input window, operand 1, single buffered']
    #allocation10 [shape = 's32[1]{0}', space=sflag, size = 0x4, scoped, tag = 'scoped memory for tpu_custom_call.1']
    #allocation11 [shape = 'u8[8192]{0}', space=vmem, size = 0x2000, scoped, tag = 'input window, operand 2, single buffered']
    #allocation12 [shape = 'u8[8192]{0}', space=vmem, size = 0x2000, scoped, tag = 'input window, operand 4, single buffered']
    #allocation13 [shape = 's32[1]{0}', space=sflag, size = 0x4, scoped, tag = 'scoped memory for tpu_custom_call.1']
    #allocation14 [shape = 'u8[8192]{0}', space=vmem, size = 0x2000, scoped, tag = 'output window, operand 0, single buffered']
    %11 = vsyncpa [#allocation7], 0
    %12 = vsyncpa [#allocation10], 0
    %13 = vsyncpa [#allocation13], 0
    %14 = vsyncpa [#allocation8], 0
    // Predicated region
    $region2: #{tpu_custom_call.1} parent=1 // pred_check
      _
    $region3: #{tpu_custom_call.1} parent=1 // pred_check_branch
      %16 = sbr.rel (0) target = $region5
    $region4: #{tpu_custom_call.1} parent=1 // pred_region
      %18 = vsyncadd [#allocation7], 0
      %s19 = sshll.u32 %s0, 4
      %s20 = int_to_ptr.hbm [resolvable:$true] %s19
      %s21 = sshll.u32 [#allocation6], 4
      %s22 = int_to_ptr.vmem [resolvable:$true] %s21
      %27 = dma.hbm_to_vmem [thread:$0]  %s20, 256, %s22, [#allocation7], 128, 128, 8
    $region5: #{tpu_custom_call.1} parent=1 // pred_fallthru
      _
    // Predicated region
    $region6: #{tpu_custom_call.1} parent=1 // pred_check
      _
    $region7: #{tpu_custom_call.1} parent=1 // pred_check_branch
      %29 = sbr.rel (0) target = $region9
    $region8: #{tpu_custom_call.1} parent=1 // pred_region
      %31 = vsyncadd [#allocation10], 0
      %s32 = sshll.u32 %s1, 4
      %s33 = int_to_ptr.hbm [resolvable:$true] %s32
      %s34 = sshll.u32 [#allocation9], 4
      %s35 = int_to_ptr.vmem [resolvable:$true] %s34
      %40 = dma.hbm_to_vmem [thread:$0]  %s33, 256, %s35, [#allocation10], 128, 128, 8
    $region9: #{tpu_custom_call.1} parent=1 // pred_fallthru
      _
    // Predicated region
    $region10: #{tpu_custom_call.1} parent=1 // pred_check
      _
    $region11: #{tpu_custom_call.1} parent=1 // pred_check_branch
      %42 = sbr.rel (0) target = $region13
    $region12: #{tpu_custom_call.1} parent=1 // pred_region
      %44 = vsyncadd [#allocation10], 0
      %s45 = sshll.u32 %s2, 4
      %s46 = int_to_ptr.hbm [resolvable:$true] %s45
      %s47 = sshll.u32 [#allocation11], 4
      %s48 = int_to_ptr.vmem [resolvable:$true] %s47
      %53 = dma.hbm_to_vmem [thread:$0]  %s46, 256, %s48, [#allocation10], 64, 64, 4
    $region13: #{tpu_custom_call.1} parent=1 // pred_fallthru
      _
    // Predicated region
    $region14: #{tpu_custom_call.1} parent=1 // pred_check
      _
    $region15: #{tpu_custom_call.1} parent=1 // pred_check_branch
      %55 = sbr.rel (0) target = $region17
    $region16: #{tpu_custom_call.1} parent=1 // pred_region
      _
    $region17: #{tpu_custom_call.1} parent=1 // pred_fallthru
      _
    // Predicated region
    $region18: #{tpu_custom_call.1} parent=1 // pred_check
      _
    $region19: #{tpu_custom_call.1} parent=1 // pred_check_branch
      %57 = sbr.rel (0) target = $region21
    $region20: #{tpu_custom_call.1} parent=1 // pred_region
      %59 = vsyncadd [#allocation13], 0
      %s60 = sshll.u32 %s4, 4
      %s61 = int_to_ptr.hbm [resolvable:$true] %s60
      %s62 = sshll.u32 [#allocation12], 4
      %s63 = int_to_ptr.vmem [resolvable:$true] %s62
      %68 = dma.hbm_to_vmem [thread:$0]  %s61, 256, %s63, [#allocation13], 64, 64, 4
    $region21: #{tpu_custom_call.1} parent=1 // pred_fallthru
      _
    // Predicated region
    $region22: #{tpu_custom_call.1} parent=1 // pred_check
      _
    $region23: #{tpu_custom_call.1} parent=1 // pred_check_branch
      %70 = sbr.rel (0) target = $region25
    $region24: #{tpu_custom_call.1} parent=1 // pred_region
      _
    $region25: #{tpu_custom_call.1} parent=1 // pred_fallthru
      _
    // Predicated region
    $region26: #{tpu_custom_call.1} parent=1 // pred_check
      _
    $region27: #{tpu_custom_call.1} parent=1 // pred_check_branch
      %72 = sbr.rel (0) target = $region29
    $region28: #{tpu_custom_call.1} parent=1 // pred_region
      %74 = dma.done [#allocation7], 256
    $region29: #{tpu_custom_call.1} parent=1 // pred_fallthru
      _
    // Predicated region
    $region30: #{tpu_custom_call.1} parent=1 // pred_check
      _
    $region31: #{tpu_custom_call.1} parent=1 // pred_check_branch
      %76 = sbr.rel (0) target = $region33
    $region32: #{tpu_custom_call.1} parent=1 // pred_region
      %78 = dma.done [#allocation10], 256
    $region33: #{tpu_custom_call.1} parent=1 // pred_fallthru
      _
    // Predicated region
    $region34: #{tpu_custom_call.1} parent=1 // pred_check
      _
    $region35: #{tpu_custom_call.1} parent=1 // pred_check_branch
      %80 = sbr.rel (0) target = $region37
    $region36: #{tpu_custom_call.1} parent=1 // pred_region
      %82 = dma.done [#allocation10], 256
    $region37: #{tpu_custom_call.1} parent=1 // pred_fallthru
      _
    // Predicated region
    $region38: #{tpu_custom_call.1} parent=1 // pred_check
      _
    $region39: #{tpu_custom_call.1} parent=1 // pred_check_branch
      %84 = sbr.rel (0) target = $region41
    $region40: #{tpu_custom_call.1} parent=1 // pred_region
      %86 = dma.done [#allocation13], 256
    $region41: #{tpu_custom_call.1} parent=1 // pred_fallthru
      _
    %p88 = scmp.eq.s32.totalorder 0, 0
    // Predicated region
    $region42: #{tpu_custom_call.1} parent=1 // pred_check
      %p89 = pneg %p88
    $region43: #{tpu_custom_call.1} parent=1 // pred_check_branch
      %91 = sbr.rel (%p89) target = $region45
    $region44: #{tpu_custom_call.1} parent=1 // pred_region
      %v92 = vld [vmem:[#allocation6] sm:$0xff]
      %v93 = vld [vmem:[#allocation6 + $0x8] sm:$0xff]
      %v94 = vpack.c.bf16 %v93, %v92
      %v95 = vld [vmem:[#allocation11] sm:$0xf]
      %v96 = vld [vmem:[#allocation11 + $0x4] sm:$0xf]
      %v97 = vld [vmem:[#allocation11 + $0x8] sm:$0xf]
      %v98 = vld [vmem:[#allocation11 + $0xc] sm:$0xf]
      %v99 = vld [vmem:[%s3] sm:$0x1]
      %v101 = vperm.slane %v99, 0
      %v107 = vunpack.c.l.b16 %v95
      %v108 = vunpack.c.l.b16 %v96
      %v109 = vunpack.c.l.b16 %v97
      %v110 = vunpack.c.l.b16 %v98
      %v111 = vpack.c.b16 %v108, %v107
      %v112 = vpack.c.b16 %v110, %v109
      %vm115 = vcmask 261120
      %v117 = vsel %vm115, %v94, 0
      %119 = vmatpush.bf16.msra.mxu0 0
      %120 = vmatpush.bf16.msra.mxu0 0
      %121 = vmatpush.bf16.msra.mxu0 0
      %122 = vmatpush.bf16.msra.mxu0 0
      %123 = vmatpush.bf16.msra.mxu0 0
      %124 = vmatpush.bf16.msra.mxu0 0
      %125 = vmatpush.bf16.msra.mxu0 %v112
      %126 = vmatpush.bf16.msra.mxu0 %v111
      %127 = vmatmul.bf16.gmra.mxu0 %v117
      %v128 = vpop.f32.mrf.mxu0
      %v129 = vadd.f32 %v101, %v128
      %v130 = vpop.f32.mrf.mxu0
      %v131 = vadd.f32 %v101, %v130
      %132 = vdwg.mxu0
      %v133 = vpack.c.bf16 %v129, %v129
      %v134 = vpack.c.bf16 %v131, %v131
      %vm135 = vcmask 257024
      %136 = vst.msk [vmem:[#allocation2] sm:$0xf] %vm135, %v133
      %137 = vst.msk [vmem:[#allocation2 + $0x4] sm:$0xf] %vm135, %v134
      %vm138 = vcmask 7168
      %139 = vst.msk [vmem:[#allocation3] sm:$0xff] %vm138, -inf
      %140 = vst.msk [vmem:[#allocation3 + $0x8] sm:$0xff] %vm138, -inf
      %141 = vst.msk [vmem:[#allocation4] sm:$0xff] %vm138, 0.0
      %142 = vst.msk [vmem:[#allocation4 + $0x8] sm:$0xff] %vm138, 0.0
      %143 = vst.msk [vmem:[#allocation5] sm:$0xff] %vm115, 0.0
      %144 = vst.msk [vmem:[#allocation5 + $0x8] sm:$0xff] %vm115, 0.0
    $region45: #{tpu_custom_call.1} parent=1 // pred_fallthru
      _
    %v145 = vld [vmem:[#allocation9] sm:$0xff]
    %v146 = vld [vmem:[#allocation9 + $0x8] sm:$0xff]
    %v147 = vpack.c.bf16 %v146, %v145
    %v148 = vld [vmem:[#allocation12] sm:$0xf]
    %v149 = vld [vmem:[#allocation12 + $0x4] sm:$0xf]
    %v150 = vld [vmem:[#allocation12 + $0x8] sm:$0xf]
    %v151 = vld [vmem:[#allocation12 + $0xc] sm:$0xf]
    %v152 = vld [vmem:[%s5] sm:$0x1]
    %v154 = vperm.slane %v152, 0
    %v160 = vunpack.c.l.b16 %v148
    %v161 = vunpack.c.l.b16 %v149
    %v162 = vunpack.c.l.b16 %v150
    %v163 = vunpack.c.l.b16 %v151
    %v164 = vpack.c.b16 %v161, %v160
    %v165 = vpack.c.b16 %v163, %v162
    %vm168 = vcmask 261120
    %v170 = vsel %vm168, %v147, 0
    %172 = vmatpush.bf16.msra.mxu0 0
    %173 = vmatpush.bf16.msra.mxu0 0
    %174 = vmatpush.bf16.msra.mxu0 0
    %175 = vmatpush.bf16.msra.mxu0 0
    %176 = vmatpush.bf16.msra.mxu0 0
    %177 = vmatpush.bf16.msra.mxu0 0
    %178 = vmatpush.bf16.msra.mxu0 %v165
    %179 = vmatpush.bf16.msra.mxu0 %v164
    %180 = vmatmul.bf16.gmra.mxu0 %v170
    %v181 = vpop.f32.mrf.mxu0
    %v182 = vadd.f32 %v154, %v181
    %v183 = vpop.f32.mrf.mxu0
    %v184 = vadd.f32 %v154, %v183
    %185 = vdwg.mxu0
    %v186 = vpack.c.bf16 %v182, %v182
    %v187 = vpack.c.bf16 %v184, %v184
    %v188 = vld [vmem:[#allocation2] sm:$0xf]
    %v189 = vld [vmem:[#allocation2 + $0x4] sm:$0xf]
    %v191 = vsel %vm168, %v188, 0
    %v194 = vsel %vm168, %v186, 0
    %196 = vmatpush.bf16.xpose.msra.mxu0 0
    %197 = vmatpush.bf16.xpose.msra.mxu0 0
    %198 = vmatpush.bf16.xpose.msra.mxu0 0
    %199 = vmatpush.bf16.xpose.msra.mxu0 0
    %200 = vmatpush.bf16.xpose.msra.mxu0 0
    %201 = vmatpush.bf16.xpose.msra.mxu0 0
    %202 = vmatpush.bf16.xpose.msra.mxu0 0
    %203 = vmatpush.bf16.xpose.msra.mxu0 %v194
    %204 = vmatmul.bf16.gmra.mxu0 %v191
    %v205 = vpop.f32.mrf.mxu0
    %v206 = vadd.f32 0.0, %v205
    %v207 = vpop.f32.mrf.mxu0
    %208 = vdwg.mxu0
    %v210 = vsel %vm168, %v189, 0
    %v213 = vsel %vm168, %v187, 0
    %215 = vmatpush.bf16.xpose.msra.mxu0 0
    %216 = vmatpush.bf16.xpose.msra.mxu0 0
    %217 = vmatpush.bf16.xpose.msra.mxu0 0
    %218 = vmatpush.bf16.xpose.msra.mxu0 0
    %219 = vmatpush.bf16.xpose.msra.mxu0 0
    %220 = vmatpush.bf16.xpose.msra.mxu0 0
    %221 = vmatpush.bf16.xpose.msra.mxu0 0
    %222 = vmatpush.bf16.xpose.msra.mxu0 %v213
    %223 = vmatmul.bf16.gmra.mxu0 %v210
    %v224 = vpop.f32.mrf.mxu0
    %v225 = vadd.f32 0.0, %v224
    %v226 = vpop.f32.mrf.mxu0
    %227 = vdwg.mxu0
    %v228 = vld [vmem:[#allocation3] sm:$0xff]
    %v229 = vld [vmem:[#allocation3 + $0x8] sm:$0xff]
    %vm230 = vcmask 64512
    %v231 = vsel %vm230, %v206, -inf
    %232 = vmax.xlane.f32.xlu0 %v231
    %v233 = vpop.xlane.xlu0 %232
    %v234 = vsel %vm230, %v225, -inf
    %235 = vmax.xlane.f32.xlu0 %v234
    %v236 = vpop.xlane.xlu0 %235
    %v237 = vmax.f32 %v228, %v233
    %v238 = vmax.f32 %v229, %v236
    %v239 = vsub.f32 %v228, %v237
    %v240 = vsub.f32 %v229, %v238
    %v241 = vmul.f32 %v239, 1.442695
    %v242 = vpow.pop %v241
    %v243 = vmul.f32 %v240, 1.442695
    %v244 = vpow.pop %v243
    %246 = vset.pattern.permute.xlu0 0
    %247 = vperm.xlu0 %246, %v237
    %v248 = vpop.permute.xlu0 %247
    %251 = vset.pattern.permute.xlu0 0
    %252 = vperm.xlu0 %251, %v238
    %v253 = vpop.permute.xlu0 %252
    %v255 = vsub.f32 %v206, %v248
    %v256 = vsub.f32 %v225, %v253
    %v257 = vmul.f32 %v255, 1.442695
    %v258 = vpow.pop %v257
    %v259 = vmul.f32 %v256, 1.442695
    %v260 = vpow.pop %v259
    %v261 = vld [vmem:[#allocation4] sm:$0xff]
    %v262 = vld [vmem:[#allocation4 + $0x8] sm:$0xff]
    %v263 = vmul.f32 %v242, %v261
    %v264 = vmul.f32 %v244, %v262
    %v265 = vsel %vm230, %v258, 0.0
    %266 = vadd.xlane.f32.xlu0 %v265
    %v267 = vpop.xlane.xlu0 %266
    %v268 = vsel %vm230, %v260, 0.0
    %269 = vadd.xlane.f32.xlu0 %v268
    %v270 = vpop.xlane.xlu0 %269
    %v271 = vadd.f32 %v263, %v267
    %v272 = vadd.f32 %v264, %v270
    %vm273 = vcmask 7168
    %274 = vst.msk [vmem:[#allocation4] sm:$0xff] %vm273, %v271
    %275 = vst.msk [vmem:[#allocation4 + $0x8] sm:$0xff] %vm273, %v272
    %v276 = vld [vmem:[#allocation5] sm:$0xff]
    %v277 = vld [vmem:[#allocation5 + $0x8] sm:$0xff]
    %279 = vset.pattern.permute.xlu0 0
    %280 = vperm.xlu0 %279, %v242
    %v281 = vpop.permute.xlu0 %280
    %284 = vset.pattern.permute.xlu0 0
    %285 = vperm.xlu0 %284, %v244
    %v286 = vpop.permute.xlu0 %285
    %v288 = vmul.f32 %v281, %v276
    %v289 = vmul.f32 %v286, %v277
    %v290 = vpack.c.bf16 %v258, %v258
    %v291 = vpack.c.bf16 %v260, %v260
    %v293 = vunpack.c.l.b16 %v186
    %v294 = vpack.c.b16 %v293, %v293
    %295 = vrot.lane.b32.xlu0 %v294, 96
    %v296 = vpop.permute.xlu0 %295
    %v298 = vsel %vm230, %v290, 0
    %vm300 = vcmask 1043456
    %v302 = vsel %vm300, %v296, 0
    %304 = vmatpush.bf16.msra.mxu0 0
    %305 = vmatpush.bf16.msra.mxu0 0
    %306 = vmatpush.bf16.msra.mxu0 0
    %307 = vmatpush.bf16.msra.mxu0 0
    %308 = vmatpush.bf16.msra.mxu0 0
    %309 = vmatpush.bf16.msra.mxu0 0
    %310 = vmatpush.bf16.msra.mxu0 0
    %311 = vmatpush.bf16.msra.mxu0 %v302
    %312 = vmatmul.bf16.gmra.mxu0 %v298
    %v313 = vpop.f32.mrf.mxu0
    %v314 = vadd.f32 0.0, %v313
    %v315 = vpop.f32.mrf.mxu0
    %316 = vdwg.mxu0
    %v318 = vunpack.c.l.b16 %v187
    %v319 = vpack.c.b16 %v318, %v318
    %320 = vrot.lane.b32.xlu0 %v319, 96
    %v321 = vpop.permute.xlu0 %320
    %v323 = vsel %vm230, %v291, 0
    %v326 = vsel %vm300, %v321, 0
    %328 = vmatpush.bf16.msra.mxu0 0
    %329 = vmatpush.bf16.msra.mxu0 0
    %330 = vmatpush.bf16.msra.mxu0 0
    %331 = vmatpush.bf16.msra.mxu0 0
    %332 = vmatpush.bf16.msra.mxu0 0
    %333 = vmatpush.bf16.msra.mxu0 0
    %334 = vmatpush.bf16.msra.mxu0 0
    %335 = vmatpush.bf16.msra.mxu0 %v326
    %336 = vmatmul.bf16.gmra.mxu0 %v323
    %v337 = vpop.f32.mrf.mxu0
    %v338 = vadd.f32 0.0, %v337
    %v339 = vpop.f32.mrf.mxu0
    %340 = vdwg.mxu0
    %v341 = vadd.f32 %v288, %v314
    %v342 = vadd.f32 %v289, %v338
    %343 = vst.msk [vmem:[#allocation5] sm:$0xff] %vm168, %v341
    %344 = vst.msk [vmem:[#allocation5 + $0x8] sm:$0xff] %vm168, %v342
    %345 = vst.msk [vmem:[#allocation3] sm:$0xff] %vm273, %v237
    %346 = vst.msk [vmem:[#allocation3 + $0x8] sm:$0xff] %vm273, %v238
    // Predicated region
    $region46: #{tpu_custom_call.1} parent=1 // pred_check
      %p347 = pneg %p88
    $region47: #{tpu_custom_call.1} parent=1 // pred_check_branch
      %349 = sbr.rel (%p347) target = $region49
    $region48: #{tpu_custom_call.1} parent=1 // pred_region
      %v350 = vld [vmem:[#allocation4] sm:$0xff]
      %v351 = vld [vmem:[#allocation4 + $0x8] sm:$0xff]
      %v352 = vrcp.pop %v350
      %v353 = vrcp.pop %v351
      %v354 = vld [vmem:[#allocation5] sm:$0xff]
      %v355 = vld [vmem:[#allocation5 + $0x8] sm:$0xff]
      %357 = vset.pattern.permute.xlu0 0
      %358 = vperm.xlu0 %357, %v352
      %v359 = vpop.permute.xlu0 %358
      %362 = vset.pattern.permute.xlu0 0
      %363 = vperm.xlu0 %362, %v353
      %v364 = vpop.permute.xlu0 %363
      %v366 = vmul.f32 %v354, %v359
      %v367 = vmul.f32 %v355, %v364
      %368 = vst.msk [vmem:[#allocation14] sm:$0xff] %vm168, %v366
      %369 = vst.msk [vmem:[#allocation14 + $0x8] sm:$0xff] %vm168, %v367
    $region49: #{tpu_custom_call.1} parent=1 // pred_fallthru
      _
    // Predicated region
    $region50: #{tpu_custom_call.1} parent=1 // pred_check
      _
    $region51: #{tpu_custom_call.1} parent=1 // pred_check_branch
      %371 = sbr.rel (0) target = $region53
    $region52: #{tpu_custom_call.1} parent=1 // pred_region
      %373 = vsyncadd [#allocation8], 0
      %s374 = sshll.u32 [#allocation14], 4
      %s375 = int_to_ptr.vmem [resolvable:$true] %s374
      %s376 = sshll.u32 %s6, 4
      %s377 = int_to_ptr.hbm [resolvable:$true] %s376
      %382 = dma.vmem_to_hbm [thread:$0]  %s375, 256, %s377, [#allocation8], 128, 128, 8
    $region53: #{tpu_custom_call.1} parent=1 // pred_fallthru
      _
    // Predicated region
    $region54: #{tpu_custom_call.1} parent=1 // pred_check
      _
    $region55: #{tpu_custom_call.1} parent=1 // pred_check_branch
      %384 = sbr.rel (0) target = $region57
    $region56: #{tpu_custom_call.1} parent=1 // pred_region
      %386 = dma.done [#allocation8], 256
    $region57: #{tpu_custom_call.1} parent=1 // pred_fallthru
      _
    %387 = vsyncpa [#allocation7], 1
    %388 = vsyncpa [#allocation10], 1
    %389 = vsyncpa [#allocation13], 1
    %390 = vsyncpa [#allocation8], 1

// kernel: tpu_custom_call.1
$region0: #{tpu_custom_call.1}
  #allocation0 [shape = 'u32[]', space=smem, size = 0x4, offset = 0x4, fixed_abs, tag = 'smem constant byte address 0x4 - core index']
  #allocation1 [shape = 'u32[72,128]{1,0:T(1,128)}', space=vmem, size = 0x9000, scoped, tag = 'internal scratch']
  #allocation2 [shape = 'bf16[2,8,32]{2,1,0:T(8,128)(2,1)}', space=vmem, size = 0x1000, scoped, tag = 'scratch operand']
  #allocation3 [shape = 'f32[2,8,1]{2,1,0:T(8,128)}', space=vmem, size = 0x2000, scoped, tag = 'scratch operand']
  #allocation4 [shape = 'f32[2,8,1]{2,1,0:T(8,128)}', space=vmem, size = 0x2000, scoped, tag = 'scratch operand']
  #allocation5 [shape = 'f32[2,8,32]{2,1,0:T(8,128)}', space=vmem, size = 0x2000, scoped, tag = 'scratch operand']
  %s0 = inlined_call_operand.hbm [shape: f32[2,8,32], index: 0, kind: input, shape index: {}]
  %s1 = inlined_call_operand.hbm [shape: f32[2,8,32], index: 1, kind: input, shape index: {}]
  %s2 = inlined_call_operand.hbm [shape: bf16[32,32], index: 2, kind: input, shape index: {}]
  %s3 = inlined_call_operand.vmem [shape: f32[1,32], index: 3, kind: input, shape index: {}]
  %s4 = inlined_call_operand.hbm [shape: bf16[32,64], index: 4, kind: input, shape index: {}]
  %s5 = inlined_call_operand.vmem [shape: f32[1,64], index: 5, kind: input, shape index: {}]
  %s6 = inlined_call_operand.hbm [shape: f32[2,8,32], index: 6, kind: output, shape index: {}]
  %s7 = sld [smem:[#allocation0]]
  $region58: #{tpu_custom_call.1} parent=0
    _
  %s9 = ssub.s32 1, %s7
  %s10 = scalar_select 0, %s9, %s7
  $region1: #{tpu_custom_call.1} parent=0
    #allocation6 [shape = 'u8[8192]{0}', space=vmem, size = 0x2000, scoped, tag = 'input window, operand 0, single buffered']
    #allocation7 [shape = 's32[1]{0}', space=sflag, size = 0x4, scoped, tag = 'scoped memory for tpu_custom_call.1']
    #allocation8 [shape = 's32[1]{0}', space=sflag, size = 0x4, scoped, tag = 'scoped memory for tpu_custom_call.1']
    #allocation9 [shape = 'u8[8192]{0}', space=vmem, size = 0x2000, scoped, tag = 'input window, operand 1, single buffered']
    #allocation10 [shape = 's32[1]{0}', space=sflag, size = 0x4, scoped, tag = 'scoped memory for tpu_custom_call.1']
    #allocation11 [shape = 'u8[8192]{0}', space=vmem, size = 0x2000, scoped, tag = 'input window, operand 2, single buffered']
    #allocation12 [shape = 'u8[8192]{0}', space=vmem, size = 0x2000, scoped, tag = 'input window, operand 4, single buffered']
    #allocation13 [shape = 's32[1]{0}', space=sflag, size = 0x4, scoped, tag = 'scoped memory for tpu_custom_call.1']
    #allocation14 [shape = 'u8[8192]{0}', space=vmem, size = 0x2000, scoped, tag = 'output window, operand 0, single buffered']
    %11 = vsyncpa [#allocation7], 0
    %12 = vsyncpa [#allocation10], 0
    %13 = vsyncpa [#allocation13], 0
    %14 = vsyncpa [#allocation8], 0
    // Predicated region
    $region2: #{tpu_custom_call.1} parent=1 // pred_check
      _
    $region3: #{tpu_custom_call.1} parent=1 // pred_check_branch
      %16 = sbr.rel (0) target = $region5
    $region4: #{tpu_custom_call.1} parent=1 // pred_region
      %18 = vsyncadd [#allocation7], 0
      %s19 = sshll.u32 %s0, 4
      %s20 = int_to_ptr.hbm [resolvable:$true] %s19
      %s21 = sshll.u32 [#allocation6], 4
      %s22 = int_to_ptr.vmem [resolvable:$true] %s21
      %27 = dma.hbm_to_vmem [thread:$0]  %s20, 256, %s22, [#allocation7], 128, 128, 8
    $region5: #{tpu_custom_call.1} parent=1 // pred_fallthru
      _
    // Predicated region
    $region6: #{tpu_custom_call.1} parent=1 // pred_check
      _
    $region7: #{tpu_custom_call.1} parent=1 // pred_check_branch
      %29 = sbr.rel (0) target = $region9
    $region8: #{tpu_custom_call.1} parent=1 // pred_region
      %31 = vsyncadd [#allocation10], 0
      %s32 = sshll.u32 %s1, 4
      %s33 = int_to_ptr.hbm [resolvable:$true] %s32
      %s34 = sshll.u32 [#allocation9], 4
      %s35 = int_to_ptr.vmem [resolvable:$true] %s34
      %40 = dma.hbm_to_vmem [thread:$0]  %s33, 256, %s35, [#allocation10], 128, 128, 8
    $region9: #{tpu_custom_call.1} parent=1 // pred_fallthru
      _
    // Predicated region
    $region10: #{tpu_custom_call.1} parent=1 // pred_check
      _
    $region11: #{tpu_custom_call.1} parent=1 // pred_check_branch
      %42 = sbr.rel (0) target = $region13
    $region12: #{tpu_custom_call.1} parent=1 // pred_region
      %44 = vsyncadd [#allocation10], 0
      %s45 = sshll.u32 %s2, 4
      %s46 = int_to_ptr.hbm [resolvable:$true] %s45
      %s47 = sshll.u32 [#allocation11], 4
      %s48 = int_to_ptr.vmem [resolvable:$true] %s47
      %53 = dma.hbm_to_vmem [thread:$0]  %s46, 256, %s48, [#allocation10], 64, 64, 4
    $region13: #{tpu_custom_call.1} parent=1 // pred_fallthru
      _
    // Predicated region
    $region14: #{tpu_custom_call.1} parent=1 // pred_check
      _
    $region15: #{tpu_custom_call.1} parent=1 // pred_check_branch
      %55 = sbr.rel (0) target = $region17
    $region16: #{tpu_custom_call.1} parent=1 // pred_region
      _
    $region17: #{tpu_custom_call.1} parent=1 // pred_fallthru
      _
    // Predicated region
    $region18: #{tpu_custom_call.1} parent=1 // pred_check
      _
    $region19: #{tpu_custom_call.1} parent=1 // pred_check_branch
      %57 = sbr.rel (0) target = $region21
    $region20: #{tpu_custom_call.1} parent=1 // pred_region
      %59 = vsyncadd [#allocation13], 0
      %s60 = sshll.u32 %s4, 4
      %s61 = int_to_ptr.hbm [resolvable:$true] %s60
      %s62 = sshll.u32 [#allocation12], 4
      %s63 = int_to_ptr.vmem [resolvable:$true] %s62
      %68 = dma.hbm_to_vmem [thread:$0]  %s61, 256, %s63, [#allocation13], 64, 64, 4
    $region21: #{tpu_custom_call.1} parent=1 // pred_fallthru
      _
    // Predicated region
    $region22: #{tpu_custom_call.1} parent=1 // pred_check
      _
    $region23: #{tpu_custom_call.1} parent=1 // pred_check_branch
      %70 = sbr.rel (0) target = $region25
    $region24: #{tpu_custom_call.1} parent=1 // pred_region
      _
    $region25: #{tpu_custom_call.1} parent=1 // pred_fallthru
      _
    // Predicated region
    $region26: #{tpu_custom_call.1} parent=1 // pred_check
      _
    $region27: #{tpu_custom_call.1} parent=1 // pred_check_branch
      %72 = sbr.rel (0) target = $region29
    $region28: #{tpu_custom_call.1} parent=1 // pred_region
      %74 = dma.done [#allocation7], 256
    $region29: #{tpu_custom_call.1} parent=1 // pred_fallthru
      _
    // Predicated region
    $region30: #{tpu_custom_call.1} parent=1 // pred_check
      _
    $region31: #{tpu_custom_call.1} parent=1 // pred_check_branch
      %76 = sbr.rel (0) target = $region33
    $region32: #{tpu_custom_call.1} parent=1 // pred_region
      %78 = dma.done [#allocation10], 256
    $region33: #{tpu_custom_call.1} parent=1 // pred_fallthru
      _
    // Predicated region
    $region34: #{tpu_custom_call.1} parent=1 // pred_check
      _
    $region35: #{tpu_custom_call.1} parent=1 // pred_check_branch
      %80 = sbr.rel (0) target = $region37
    $region36: #{tpu_custom_call.1} parent=1 // pred_region
      %82 = dma.done [#allocation10], 256
    $region37: #{tpu_custom_call.1} parent=1 // pred_fallthru
      _
    // Predicated region
    $region38: #{tpu_custom_call.1} parent=1 // pred_check
      _
    $region39: #{tpu_custom_call.1} parent=1 // pred_check_branch
      %84 = sbr.rel (0) target = $region41
    $region40: #{tpu_custom_call.1} parent=1 // pred_region
      %86 = dma.done [#allocation13], 256
    $region41: #{tpu_custom_call.1} parent=1 // pred_fallthru
      _
    %p88 = scmp.eq.s32.totalorder 0, 0
    // Predicated region
    $region42: #{tpu_custom_call.1} parent=1 // pred_check
      %p89 = pneg %p88
    $region43: #{tpu_custom_call.1} parent=1 // pred_check_branch
      %91 = sbr.rel (%p89) target = $region45
    $region44: #{tpu_custom_call.1} parent=1 // pred_region
      %v92 = vld [vmem:[#allocation6] sm:$0xff]
      %v93 = vld [vmem:[#allocation6 + $0x8] sm:$0xff]
      %v94 = vpack.c.bf16 %v93, %v92
      %v95 = vld [vmem:[#allocation11] sm:$0xf]
      %v96 = vld [vmem:[#allocation11 + $0x4] sm:$0xf]
      %v97 = vld [vmem:[#allocation11 + $0x8] sm:$0xf]
      %v98 = vld [vmem:[#allocation11 + $0xc] sm:$0xf]
      %v99 = vld [vmem:[%s3] sm:$0x1]
      %v101 = vperm.slane %v99, 0
      %v107 = vunpack.c.l.b16 %v95
      %v108 = vunpack.c.l.b16 %v96
      %v109 = vunpack.c.l.b16 %v97
      %v110 = vunpack.c.l.b16 %v98
      %v111 = vpack.c.b16 %v108, %v107
      %v112 = vpack.c.b16 %v110, %v109
      %vm115 = vcmask 261120
      %v117 = vsel %vm115, %v94, 0
      %119 = vmatpush.bf16.msra.mxu0 0
      %120 = vmatpush.bf16.msra.mxu0 0
      %121 = vmatpush.bf16.msra.mxu0 0
      %122 = vmatpush.bf16.msra.mxu0 0
      %123 = vmatpush.bf16.msra.mxu0 0
      %124 = vmatpush.bf16.msra.mxu0 0
      %125 = vmatpush.bf16.msra.mxu0 %v112
      %126 = vmatpush.bf16.msra.mxu0 %v111
      %127 = vmatmul.bf16.gmra.mxu0 %v117
      %v128 = vpop.f32.mrf.mxu0
      %v129 = vadd.f32 %v101, %v128
      %v130 = vpop.f32.mrf.mxu0
      %v131 = vadd.f32 %v101, %v130
      %132 = vdwg.mxu0
      %v133 = vpack.c.bf16 %v129, %v129
      %v134 = vpack.c.bf16 %v131, %v131
      %vm135 = vcmask 257024
      %136 = vst.msk [vmem:[#allocation2] sm:$0xf] %vm135, %v133
      %137 = vst.msk [vmem:[#allocation2 + $0x4] sm:$0xf] %vm135, %v134
      %vm138 = vcmask 7168
      %139 = vst.msk [vmem:[#allocation3] sm:$0xff] %vm138, -inf
      %140 = vst.msk [vmem:[#allocation3 + $0x8] sm:$0xff] %vm138, -inf
      %141 = vst.msk [vmem:[#allocation4] sm:$0xff] %vm138, 0.0
      %142 = vst.msk [vmem:[#allocation4 + $0x8] sm:$0xff] %vm138, 0.0
      %143 = vst.msk [vmem:[#allocation5] sm:$0xff] %vm115, 0.0
      %144 = vst.msk [vmem:[#allocation5 + $0x8] sm:$0xff] %vm115, 0.0
    $region45: #{tpu_custom_call.1} parent=1 // pred_fallthru
      _
    %v145 = vld [vmem:[#allocation9] sm:$0xff]
    %v146 = vld [vmem:[#allocation9 + $0x8] sm:$0xff]
    %v147 = vpack.c.bf16 %v146, %v145
    %v148 = vld [vmem:[#allocation12] sm:$0xf]
    %v149 = vld [vmem:[#allocation12 + $0x4] sm:$0xf]
    %v150 = vld [vmem:[#allocation12 + $0x8] sm:$0xf]
    %v151 = vld [vmem:[#allocation12 + $0xc] sm:$0xf]
    %v152 = vld [vmem:[%s5] sm:$0x1]
    %v154 = vperm.slane %v152, 0
    %v160 = vunpack.c.l.b16 %v148
    %v161 = vunpack.c.l.b16 %v149
    %v162 = vunpack.c.l.b16 %v150
    %v163 = vunpack.c.l.b16 %v151
    %v164 = vpack.c.b16 %v161, %v160
    %v165 = vpack.c.b16 %v163, %v162
    %vm168 = vcmask 261120
    %v170 = vsel %vm168, %v147, 0
    %172 = vmatpush.bf16.msra.mxu0 0
    %173 = vmatpush.bf16.msra.mxu0 0
    %174 = vmatpush.bf16.msra.mxu0 0
    %175 = vmatpush.bf16.msra.mxu0 0
    %176 = vmatpush.bf16.msra.mxu0 0
    %177 = vmatpush.bf16.msra.mxu0 0
    %178 = vmatpush.bf16.msra.mxu0 %v165
    %179 = vmatpush.bf16.msra.mxu0 %v164
    %180 = vmatmul.bf16.gmra.mxu0 %v170
    %v181 = vpop.f32.mrf.mxu0
    %v182 = vadd.f32 %v154, %v181
    %v183 = vpop.f32.mrf.mxu0
    %v184 = vadd.f32 %v154, %v183
    %185 = vdwg.mxu0
    %v186 = vpack.c.bf16 %v182, %v182
    %v187 = vpack.c.bf16 %v184, %v184
    %v188 = vld [vmem:[#allocation2] sm:$0xf]
    %v189 = vld [vmem:[#allocation2 + $0x4] sm:$0xf]
    %v191 = vsel %vm168, %v188, 0
    %v194 = vsel %vm168, %v186, 0
    %196 = vmatpush.bf16.xpose.msra.mxu0 0
    %197 = vmatpush.bf16.xpose.msra.mxu0 0
    %198 = vmatpush.bf16.xpose.msra.mxu0 0
    %199 = vmatpush.bf16.xpose.msra.mxu0 0
    %200 = vmatpush.bf16.xpose.msra.mxu0 0
    %201 = vmatpush.bf16.xpose.msra.mxu0 0
    %202 = vmatpush.bf16.xpose.msra.mxu0 0
    %203 = vmatpush.bf16.xpose.msra.mxu0 %v194
    %204 = vmatmul.bf16.gmra.mxu0 %v191
    %v205 = vpop.f32.mrf.mxu0
    %v206 = vadd.f32 0.0, %v205
    %v207 = vpop.f32.mrf.mxu0
    %208 = vdwg.mxu0
    %v210 = vsel %vm168, %v189, 0
    %v213 = vsel %vm168, %v187, 0
    %215 = vmatpush.bf16.xpose.msra.mxu0 0
    %216 = vmatpush.bf16.xpose.msra.mxu0 0
    %217 = vmatpush.bf16.xpose.msra.mxu0 0
    %218 = vmatpush.bf16.xpose.msra.mxu0 0
    %219 = vmatpush.bf16.xpose.msra.mxu0 0
    %220 = vmatpush.bf16.xpose.msra.mxu0 0
    %221 = vmatpush.bf16.xpose.msra.mxu0 0
    %222 = vmatpush.bf16.xpose.msra.mxu0 %v213
    %223 = vmatmul.bf16.gmra.mxu0 %v210
    %v224 = vpop.f32.mrf.mxu0
    %v225 = vadd.f32 0.0, %v224
    %v226 = vpop.f32.mrf.mxu0
    %227 = vdwg.mxu0
    %v228 = vld [vmem:[#allocation3] sm:$0xff]
    %v229 = vld [vmem:[#allocation3 + $0x8] sm:$0xff]
    %vm230 = vcmask 64512
    %v231 = vsel %vm230, %v206, -inf
    %232 = vmax.xlane.f32.xlu0 %v231
    %v233 = vpop.xlane.xlu0 %232
    %v234 = vsel %vm230, %v225, -inf
    %235 = vmax.xlane.f32.xlu0 %v234
    %v236 = vpop.xlane.xlu0 %235
    %v237 = vmax.f32 %v228, %v233
    %v238 = vmax.f32 %v229, %v236
    %v239 = vsub.f32 %v228, %v237
    %v240 = vsub.f32 %v229, %v238
    %v241 = vmul.f32 %v239, 1.442695
    %v242 = vpow.pop %v241
    %v243 = vmul.f32 %v240, 1.442695
    %v244 = vpow.pop %v243
    %246 = vset.pattern.permute.xlu0 0
    %247 = vperm.xlu0 %246, %v237
    %v248 = vpop.permute.xlu0 %247
    %251 = vset.pattern.permute.xlu0 0
    %252 = vperm.xlu0 %251, %v238
    %v253 = vpop.permute.xlu0 %252
    %v255 = vsub.f32 %v206, %v248
    %v256 = vsub.f32 %v225, %v253
    %v257 = vmul.f32 %v255, 1.442695
    %v258 = vpow.pop %v257
    %v259 = vmul.f32 %v256, 1.442695
    %v260 = vpow.pop %v259
    %v261 = vld [vmem:[#allocation4] sm:$0xff]
    %v262 = vld [vmem:[#allocation4 + $0x8] sm:$0xff]
    %v263 = vmul.f32 %v242, %v261
    %v264 = vmul.f32 %v244, %v262
    %v265 = vsel %vm230, %v258, 0.0
    %266 = vadd.xlane.f32.xlu0 %v265
    %v267 = vpop.xlane.xlu0 %266
    %v268 = vsel %vm230, %v260, 0.0
    %269 = vadd.xlane.f32.xlu0 %v268
    %v270 = vpop.xlane.xlu0 %269
    %v271 = vadd.f32 %v263, %v267
    %v272 = vadd.f32 %v264, %v270
    %vm273 = vcmask 7168
    %274 = vst.msk [vmem:[#allocation4] sm:$0xff] %vm273, %v271
    %275 = vst.msk [vmem:[#allocation4 + $0x8] sm:$0xff] %vm273, %v272
    %v276 = vld [vmem:[#allocation5] sm:$0xff]
    %v277 = vld [vmem:[#allocation5 + $0x8] sm:$0xff]
    %279 = vset.pattern.permute.xlu0 0
    %280 = vperm.xlu0 %279, %v242
    %v281 = vpop.permute.xlu0 %280
    %284 = vset.pattern.permute.xlu0 0
    %285 = vperm.xlu0 %284, %v244
    %v286 = vpop.permute.xlu0 %285
    %v288 = vmul.f32 %v281, %v276
    %v289 = vmul.f32 %v286, %v277
    %v290 = vpack.c.bf16 %v258, %v258
    %v291 = vpack.c.bf16 %v260, %v260
    %v293 = vunpack.c.l.b16 %v186
    %v294 = vpack.c.b16 %v293, %v293
    %295 = vrot.lane.b32.xlu0 %v294, 96
    %v296 = vpop.permute.xlu0 %295
    %v298 = vsel %vm230, %v290, 0
    %vm300 = vcmask 1043456
    %v302 = vsel %vm300, %v296, 0
    %304 = vmatpush.bf16.msra.mxu0 0
    %305 = vmatpush.bf16.msra.mxu0 0
    %306 = vmatpush.bf16.msra.mxu0 0
    %307 = vmatpush.bf16.msra.mxu0 0
    %308 = vmatpush.bf16.msra.mxu0 0
    %309 = vmatpush.bf16.msra.mxu0 0
    %310 = vmatpush.bf16.msra.mxu0 0
    %311 = vmatpush.bf16.msra.mxu0 %v302
    %312 = vmatmul.bf16.gmra.mxu0 %v298
    %v313 = vpop.f32.mrf.mxu0
    %v314 = vadd.f32 0.0, %v313
    %v315 = vpop.f32.mrf.mxu0
    %316 = vdwg.mxu0
    %v318 = vunpack.c.l.b16 %v187
    %v319 = vpack.c.b16 %v318, %v318
    %320 = vrot.lane.b32.xlu0 %v319, 96
    %v321 = vpop.permute.xlu0 %320
    %v323 = vsel %vm230, %v291, 0
    %v326 = vsel %vm300, %v321, 0
    %328 = vmatpush.bf16.msra.mxu0 0
    %329 = vmatpush.bf16.msra.mxu0 0
    %330 = vmatpush.bf16.msra.mxu0 0
    %331 = vmatpush.bf16.msra.mxu0 0
    %332 = vmatpush.bf16.msra.mxu0 0
    %333 = vmatpush.bf16.msra.mxu0 0
    %334 = vmatpush.bf16.msra.mxu0 0
    %335 = vmatpush.bf16.msra.mxu0 %v326
    %336 = vmatmul.bf16.gmra.mxu0 %v323
    %v337 = vpop.f32.mrf.mxu0
    %v338 = vadd.f32 0.0, %v337
    %v339 = vpop.f32.mrf.mxu0
    %340 = vdwg.mxu0
    %v341 = vadd.f32 %v288, %v314
    %v342 = vadd.f32 %v289, %v338
    %343 = vst.msk [vmem:[#allocation5] sm:$0xff] %vm168, %v341
    %344 = vst.msk [vmem:[#allocation5 + $0x8] sm:$0xff] %vm168, %v342
    %345 = vst.msk [vmem:[#allocation3] sm:$0xff] %vm273, %v237
    %346 = vst.msk [vmem:[#allocation3 + $0x8] sm:$0xff] %vm273, %v238
    // Predicated region
    $region46: #{tpu_custom_call.1} parent=1 // pred_check
      %p347 = pneg %p88
    $region47: #{tpu_custom_call.1} parent=1 // pred_check_branch
      %349 = sbr.rel (%p347) target = $region49
    $region48: #{tpu_custom_call.1} parent=1 // pred_region
      %v350 = vld [vmem:[#allocation4] sm:$0xff]
      %v351 = vld [vmem:[#allocation4 + $0x8] sm:$0xff]
      %v352 = vrcp.pop %v350
      %v353 = vrcp.pop %v351
      %v354 = vld [vmem:[#allocation5] sm:$0xff]
      %v355 = vld [vmem:[#allocation5 + $0x8] sm:$0xff]
      %357 = vset.pattern.permute.xlu0 0
      %358 = vperm.xlu0 %357, %v352
      %v359 = vpop.permute.xlu0 %358
      %362 = vset.pattern.permute.xlu0 0
      %363 = vperm.xlu0 %362, %v353
      %v364 = vpop.permute.xlu0 %363
      %v366 = vmul.f32 %v354, %v359
      %v367 = vmul.f32 %v355, %v364
      %368 = vst.msk [vmem:[#allocation14] sm:$0xff] %vm168, %v366
      %369 = vst.msk [vmem:[#allocation14 + $0x8] sm:$0xff] %vm168, %v367
    $region49: #{tpu_custom_call.1} parent=1 // pred_fallthru
      _
    // Predicated region
    $region50: #{tpu_custom_call.1} parent=1 // pred_check
      _
    $region51: #{tpu_custom_call.1} parent=1 // pred_check_branch
      %371 = sbr.rel (0) target = $region53
    $region52: #{tpu_custom_call.1} parent=1 // pred_region
      %373 = vsyncadd [#allocation8], 0
      %s374 = sshll.u32 [#allocation14], 4
      %s375 = int_to_ptr.vmem [resolvable:$true] %s374
      %s376 = sshll.u32 %s6, 4
      %s377 = int_to_ptr.hbm [resolvable:$true] %s376
      %382 = dma.vmem_to_hbm [thread:$0]  %s375, 256, %s377, [#allocation8], 128, 128, 8
    $region53: #{tpu_custom_call.1} parent=1 // pred_fallthru
      _
    // Predicated region
    $region54: #{tpu_custom_call.1} parent=1 // pred_check
      _
    $region55: #{tpu_custom_call.1} parent=1 // pred_check_branch
      %384 = sbr.rel (0) target = $region57
    $region56: #{tpu_custom_call.1} parent=1 // pred_region
      %386 = dma.done [#allocation8], 256
    $region57: #{tpu_custom_call.1} parent=1 // pred_fallthru
      _
    %387 = vsyncpa [#allocation7], 1
    %388 = vsyncpa [#allocation10], 1
    %389 = vsyncpa [#allocation13], 1
    %390 = vsyncpa [#allocation8], 1

</llo_original>
